<compile_context>
chip_gen: v6e
topology: v6e:2x2x1
jax: 0.10.0
libtpu: 0.0.40
codegen_flags: <defaults>
</compile_context>

<pallas_src>
import functools

import jax
import jax.numpy as jnp
from jax.experimental import pallas as pl
from jax.experimental.pallas import tpu as pltpu

_BN_EPS = 1e-5


def _banded_conv_weight(w_hwio, w_out):
    """(3,3,Ci,Co) HWIO -> (3, W*Ci, W*Co) per-row-tap banded matrices.

    In the lane-packed layout (rows = N*H, lanes = W*C) a 'SAME' 3x3 conv is
        out = sum_dh  tap_dh @ mats[dh],
    where tap_dh is the dh-row-shifted packed input.  The dw shift, the
    channel contraction AND the W zero-padding are all folded into mats[dh]
    (truncated edge bands), so every activation stays exactly W*C lanes wide.
    """
    kh, kw, ci, co = w_hwio.shape
    mats = []
    for dh in range(kh):
        m = jnp.zeros((w_out * ci, w_out * co), w_hwio.dtype)
        for dw in range(kw):
            band = jnp.eye(w_out, k=1 - dw, dtype=w_hwio.dtype)
            m = m + jnp.kron(band, w_hwio[dh, dw])
        mats.append(m)
    return jnp.stack(mats, axis=0)


def _conv3_relu_kernel(x_ref, w3_ref, b3_ref, out_ref):
    """Module output when use_1x1conv: relu(conv3(X) + b3) on one row tile."""
    out_ref[...] = jnp.maximum(
        jnp.dot(x_ref[...], w3_ref[...], preferred_element_type=jnp.float32)
        + b3_ref[...], 0.0)


def _relu_kernel(x_ref, out_ref):
    """Module output when the shortcut is the identity: relu(X)."""
    out_ref[...] = jnp.maximum(x_ref[...], 0.0)


def _residual_y_kernel(dims, use_1x1conv, *refs):
    """Full residual forward in the lane-packed (N*H, W*C) layout.

    Computes the module output (relu(shortcut)) and the Y branch
    Y = bn2(conv2(relu(bn1(conv1(X))))) + shortcut (module-discarded).
    """
    N, H, W, Cin, Cm = dims
    WCin, WCm, rows = W * Cin, W * Cm, N * H

    refs = list(refs)
    xpad_ref = refs.pop(0)            # (N, H+2, W*Cin) bf16, H-padded input
    w1_ref = refs.pop(0)              # (3, W*Cin, W*Cm) bf16 banded conv1
    w2_ref = refs.pop(0)              # (3, W*Cm,  W*Cm) bf16 banded conv2
    c_ref = refs.pop(0)               # (6|7, W*Cm) f32: b1,g1,be1,b2,g2,be2[,b3]
    p_ref = refs.pop(0)               # (W*Cm, W*Cm) f32 0/1 channel-sum matrix
    if use_1x1conv:
        w3_ref = refs.pop(0)          # (W*Cin, W*Cm) bf16 block-diag 1x1 conv
        out_ref = refs.pop(0)         # (N*H, W*Cm) f32 module output
    y_ref = refs.pop(0)               # (N*H, W*Cm) f32 Y branch
    ypad = refs.pop(0)                # (N, H+2, W*Cm) bf16 scratch

    b1, g1, be1 = c_ref[0:1, :], c_ref[1:2, :], c_ref[2:3, :]
    b2, g2, be2 = c_ref[3:4, :], c_ref[4:5, :], c_ref[5:6, :]

    x_int = xpad_ref[:, 1:H + 1, :].reshape(rows, WCin)      # interior rows

    # ---- shortcut branch (this IS the module output, post-relu) ------------
    if use_1x1conv:
        x_sc = jnp.dot(x_int, w3_ref[...],
                       preferred_element_type=jnp.float32) + c_ref[6:7, :]
        out_ref[...] = jnp.maximum(x_sc, 0.0)    # lane-dense, unmasked store
    else:
        x_sc = x_int.astype(jnp.float32)

    inv_cnt = 1.0 / float(N * H * W)

    def batchnorm(v, g, be):
        # One-pass batch stats; the two (1, W*Cm) row reductions are stacked
        # and hit the MXU once; the 0/1 matmul sums the W lane positions of
        # each channel and broadcasts the totals back to every lane.
        stats = jnp.concatenate([jnp.sum(v, axis=0, keepdims=True),
                                 jnp.sum(v * v, axis=0, keepdims=True)], axis=0)
        stats = jnp.dot(stats, p_ref[...], preferred_element_type=jnp.float32)
        mean = stats[0:1, :] * inv_cnt
        var = stats[1:2, :] * inv_cnt - mean * mean
        return (v - mean) * jax.lax.rsqrt(var + _BN_EPS) * g + be

    # ---- conv1: 3 row-tap banded matmuls over the H-padded input -----------
    y = b1 + jnp.dot(xpad_ref[:, 0:H, :].reshape(rows, WCin), w1_ref[0],
                     preferred_element_type=jnp.float32)
    for dh in (1, 2):
        y = y + jnp.dot(xpad_ref[:, dh:dh + H, :].reshape(rows, WCin),
                        w1_ref[dh], preferred_element_type=jnp.float32)
    y = jnp.maximum(batchnorm(y, g1, be1), 0.0)

    # ---- conv2: bf16 padded scratch (only the 2 halo rows are zeroed), -----
    # ---- then 3 row-tap banded matmuls with f32 accumulation. --------------
    ypad[:, 0:1, :] = jnp.zeros((N, 1, WCm), jnp.bfloat16)
    ypad[:, H + 1:H + 2, :] = jnp.zeros((N, 1, WCm), jnp.bfloat16)
    ypad[:, 1:H + 1, :] = y.astype(jnp.bfloat16).reshape(N, H, WCm)

    acc = b2 + jnp.dot(ypad[:, 0:H, :].reshape(rows, WCm), w2_ref[0],
                       preferred_element_type=jnp.float32)
    for dh in (1, 2):
        acc = acc + jnp.dot(ypad[:, dh:dh + H, :].reshape(rows, WCm),
                            w2_ref[dh], preferred_element_type=jnp.float32)
    y = batchnorm(acc, g2, be2)

    # Y += X (faithfully computed; the module discards it and returns relu(X)).
    y_ref[...] = y + x_sc


def residual_forward(x_nchw, params, *, use_1x1conv, strides=1, return_y=False):
    """Pallas forward of the PyTorch Residual module (returns NCHW).

    Module output is relu(conv3(X)) if use_1x1conv else relu(X).  With
    return_y=True also returns the module-discarded Y branch for validation.
    """
    assert strides == 1, "TODO(synk): strides > 1 not implemented"
    x = jnp.transpose(x_nchw, (0, 2, 3, 1)).astype(jnp.float32)   # NCHW -> NHWC
    N, H, W, Cin = x.shape
    Cm = params["w1"].shape[-1]
    if not use_1x1conv:
        assert Cin == Cm, "identity shortcut requires matching channels"

    rows, WCin, WCm = N * H, W * Cin, W * Cm
    vmem = functools.partial(pl.BlockSpec, memory_space=pltpu.MemorySpace.VMEM)

    def tile_ch(v):   # per-channel (C,) -> (1, W*C) tiled across packed lanes
        return jnp.tile(v.reshape(1, -1), (1, W)).astype(jnp.float32)

    def unpack(pk, c):   # (N*H, W*c) packed -> NCHW
        return jnp.transpose(pk.reshape(N, H, W, c), (0, 3, 1, 2))

    # ---------- module-output-only path: row-tiled, pipelined grid ----------
    if not return_y:
        tile = rows if rows <= 512 else 512
        grid = (pl.cdiv(rows, tile),)
        cp = pltpu.CompilerParams(dimension_semantics=("parallel",))
        if use_1x1conv:
            x_pk = x.reshape(rows, WCin).astype(jnp.bfloat16)
            w3b = jnp.kron(jnp.eye(W, dtype=jnp.float32),
                           params["w3"]).astype(jnp.bfloat16)
            out_pk = pl.pallas_call(
                _conv3_relu_kernel,
                out_shape=jax.ShapeDtypeStruct((rows, WCm), jnp.float32),
                grid_spec=pltpu.PrefetchScalarGridSpec(
                    num_scalar_prefetch=0, grid=grid,
                    in_specs=[pl.BlockSpec((tile, WCin), lambda i: (i, 0)),
                              pl.BlockSpec((WCin, WCm), lambda i: (0, 0)),
                              pl.BlockSpec((1, WCm), lambda i: (0, 0))],
                    out_specs=pl.BlockSpec((tile, WCm), lambda i: (i, 0))),
                compiler_params=cp,
            )(x_pk, w3b, tile_ch(params["b3"]))
            return unpack(out_pk, Cm)
        out_pk = pl.pallas_call(
            _relu_kernel,
            out_shape=jax.ShapeDtypeStruct((rows, WCin), jnp.float32),
            grid_spec=pltpu.PrefetchScalarGridSpec(
                num_scalar_prefetch=0, grid=grid,
                in_specs=[pl.BlockSpec((tile, WCin), lambda i: (i, 0))],
                out_specs=pl.BlockSpec((tile, WCin), lambda i: (i, 0))),
            compiler_params=cp,
        )(x.reshape(rows, WCin))
        return unpack(out_pk, Cin)

    # ---------- full path (module output + Y branch), single block ----------
    # TODO(synk): for large N/H this needs a row grid with a two-pass BN
    # (stats kernel + apply kernel); full-batch BN stats force a single block
    # here, which is also fastest at these (<1 MiB) shapes.
    xpad_pk = jnp.pad(x, ((0, 0), (1, 1), (0, 0), (0, 0))) \
        .reshape(N, H + 2, WCin).astype(jnp.bfloat16)          # H padding only
    w1b = _banded_conv_weight(params["w1"], W).astype(jnp.bfloat16)
    w2b = _banded_conv_weight(params["w2"], W).astype(jnp.bfloat16)
    crows = [tile_ch(params["b1"]), tile_ch(params["g1"]), tile_ch(params["be1"]),
             tile_ch(params["b2"]), tile_ch(params["g2"]), tile_ch(params["be2"])]
    if use_1x1conv:
        crows.append(tile_ch(params["b3"]))
    cvec = jnp.concatenate(crows, axis=0)
    chan_sum = jnp.tile(jnp.eye(Cm, dtype=jnp.float32), (W, W))

    args = [xpad_pk, w1b, w2b, cvec, chan_sum]
    out_shapes = []
    if use_1x1conv:
        args.append(jnp.kron(jnp.eye(W, dtype=jnp.float32),
                             params["w3"]).astype(jnp.bfloat16))
        out_shapes.append(jax.ShapeDtypeStruct((rows, WCm), jnp.float32))
    out_shapes.append(jax.ShapeDtypeStruct((rows, WCm), jnp.float32))       # Y

    outs = pl.pallas_call(
        functools.partial(_residual_y_kernel, (N, H, W, Cin, Cm), use_1x1conv),
        out_shape=tuple(out_shapes),
        in_specs=[vmem() for _ in args],
        out_specs=tuple(vmem() for _ in out_shapes),
        scratch_shapes=[pltpu.VMEM((N, H + 2, WCm), jnp.bfloat16)],
    )(*args)

    if use_1x1conv:
        out_nchw, y_nchw = unpack(outs[0], Cm), unpack(outs[1], Cm)
    else:
        out_nchw = jnp.transpose(jnp.maximum(x, 0.0), (0, 3, 1, 2))  # exact relu
        y_nchw = unpack(outs[0], Cm)
    return out_nchw, y_nchw


def _reference(x_nchw, params, use_1x1conv):
    """Pure-JAX reference of the PyTorch forward (NHWC internally)."""
    x = jnp.transpose(x_nchw, (0, 2, 3, 1)).astype(jnp.float32)

    def conv(z, w_hwio, b):
        return jax.lax.conv_general_dilated(
            z, w_hwio, window_strides=(1, 1), padding="SAME",
            dimension_numbers=("NHWC", "HWIO", "NHWC"),
            precision=jax.lax.Precision.HIGHEST) + b.reshape(1, 1, 1, -1)

    def bn(z, g, b):
        m = jnp.mean(z, axis=(0, 1, 2), keepdims=True)
        v = jnp.mean((z - m) ** 2, axis=(0, 1, 2), keepdims=True)
        return (g.reshape(1, 1, 1, -1) * (z - m) * jax.lax.rsqrt(v + _BN_EPS)
                + b.reshape(1, 1, 1, -1))

    y = jax.nn.relu(bn(conv(x, params["w1"], params["b1"]),
                       params["g1"], params["be1"]))
    y = bn(conv(y, params["w2"], params["b2"]), params["g2"], params["be2"])
    if use_1x1conv:
        x_sc = (jnp.einsum("nhwc,cd->nhwd", x, params["w3"],
                           precision=jax.lax.Precision.HIGHEST)
                + params["b3"].reshape(1, 1, 1, -1))
    else:
        x_sc = x
    y = y + x_sc
    out = jax.nn.relu(x_sc)
    return (jnp.transpose(out, (0, 3, 1, 2)),
            jnp.transpose(y, (0, 3, 1, 2)))


if __name__ == "__main__":
    N, Cin, H, W, Cm = 2, 4, 16, 16, 8      # W*Cm = 128 -> lane-dense packing
    key = jax.random.PRNGKey(0)
    ks = jax.random.split(key, 10)

    def uinit(k, shape, fan_in):            # kaiming_uniform-style init
        bound = 1.0 / (fan_in ** 0.5)
        return jax.random.uniform(k, shape, jnp.float32, -bound, bound)

    params = dict(
        w1=uinit(ks[0], (3, 3, Cin, Cm), 9 * Cin),     # conv1 (HWIO)
        b1=uinit(ks[1], (Cm,), 9 * Cin),
        w2=uinit(ks[2], (3, 3, Cm, Cm), 9 * Cm),       # conv2 (HWIO)
        b2=uinit(ks[3], (Cm,), 9 * Cm),
        w3=uinit(ks[4], (Cin, Cm), Cin),               # conv3 (1x1), as (Cin, Cm)
        b3=uinit(ks[5], (Cm,), Cin),
        g1=jnp.ones((Cm,), jnp.float32), be1=jnp.zeros((Cm,), jnp.float32),
        g2=jnp.ones((Cm,), jnp.float32), be2=jnp.zeros((Cm,), jnp.float32),
    )
    x_nchw = jax.random.normal(ks[6], (N, Cin, H, W), jnp.float32)

    # Full path: validates both the module output and the (discarded) Y branch.
    out, y_branch = residual_forward(x_nchw, params, use_1x1conv=True,
                                     strides=1, return_y=True)
    jax.block_until_ready((out, y_branch))
    ref_out, ref_y = _reference(x_nchw, params, use_1x1conv=True)
    assert out.shape == (N, Cm, H, W), out.shape
    assert jnp.allclose(out, ref_out, atol=2e-2, rtol=2e-2), "output mismatch"
    assert jnp.allclose(y_branch, ref_y, atol=2e-2, rtol=2e-2), "Y-branch mismatch"

    # Module-output-only path: row-tiled, pipelined conv3+relu kernel.
    out_fast = residual_forward(x_nchw, params, use_1x1conv=True, return_y=False)
    jax.block_until_ready(out_fast)
    assert jnp.allclose(out_fast, ref_out, atol=2e-2, rtol=2e-2), "fast-path mismatch"

    # Identity-shortcut variant (Cin == Cm, no conv3).
    params_id = dict(
        w1=uinit(ks[7], (3, 3, Cm, Cm), 9 * Cm), b1=uinit(ks[8], (Cm,), 9 * Cm),
        w2=params["w2"], b2=params["b2"],
        g1=params["g1"], be1=params["be1"], g2=params["g2"], be2=params["be2"],
    )
    x2_nchw = jax.random.normal(ks[9], (N, Cm, H, W), jnp.float32)
    out_id, y_id = residual_forward(x2_nchw, params_id, use_1x1conv=False,
                                    return_y=True)
    jax.block_until_ready((out_id, y_id))
    ref_out_id, ref_y_id = _reference(x2_nchw, params_id, use_1x1conv=False)
    assert jnp.allclose(out_id, ref_out_id, atol=2e-2, rtol=2e-2), "identity out mismatch"
    assert jnp.allclose(y_id, ref_y_id, atol=2e-2, rtol=2e-2), "identity Y mismatch"

    # Identity-shortcut module-output path (pure relu kernel, gridded).
    out_id_fast = residual_forward(x2_nchw, params_id, use_1x1conv=False,
                                   return_y=False)
    jax.block_until_ready(out_id_fast)
    assert jnp.allclose(out_id_fast, ref_out_id, atol=2e-2, rtol=2e-2), \
        "identity fast-path mismatch"

    print("KERNEL_OK")
</pallas_src>

<mosaic_0001>
module attributes {stable_mosaic.version = 11 : i64} {
  func.func @_residual_y_kernel(%arg0: memref<2x18x64xbf16, #tpu.memory_space<vmem>>, %arg1: memref<3x64x128xbf16, #tpu.memory_space<vmem>>, %arg2: memref<3x128x128xbf16, #tpu.memory_space<vmem>>, %arg3: memref<7x128xf32, #tpu.memory_space<vmem>>, %arg4: memref<128x128xf32, #tpu.memory_space<vmem>>, %arg5: memref<64x128xbf16, #tpu.memory_space<vmem>>, %arg6: memref<32x128xf32, #tpu.memory_space<vmem>>, %arg7: memref<32x128xf32, #tpu.memory_space<vmem>>, %arg8: memref<2x18x128xbf16, #tpu.memory_space<vmem>>) attributes {dimension_semantics = [], scalar_prefetch = 0 : i64, scratch_operands = 1 : i64, tpu.core_type = #tpu.core_type<tc>} {
    %c0 = arith.constant 0 : index
    %c0_0 = arith.constant 0 : index
    %0 = vector.load %arg3[%c0, %c0_0] : memref<7x128xf32, #tpu.memory_space<vmem>>, vector<1x128xf32>
    %c1 = arith.constant 1 : index
    %c0_1 = arith.constant 0 : index
    %1 = vector.load %arg3[%c1, %c0_1] : memref<7x128xf32, #tpu.memory_space<vmem>>, vector<1x128xf32>
    %c2 = arith.constant 2 : index
    %c0_2 = arith.constant 0 : index
    %2 = vector.load %arg3[%c2, %c0_2] : memref<7x128xf32, #tpu.memory_space<vmem>>, vector<1x128xf32>
    %c3 = arith.constant 3 : index
    %c0_3 = arith.constant 0 : index
    %3 = vector.load %arg3[%c3, %c0_3] : memref<7x128xf32, #tpu.memory_space<vmem>>, vector<1x128xf32>
    %c4 = arith.constant 4 : index
    %c0_4 = arith.constant 0 : index
    %4 = vector.load %arg3[%c4, %c0_4] : memref<7x128xf32, #tpu.memory_space<vmem>>, vector<1x128xf32>
    %c5 = arith.constant 5 : index
    %c0_5 = arith.constant 0 : index
    %5 = vector.load %arg3[%c5, %c0_5] : memref<7x128xf32, #tpu.memory_space<vmem>>, vector<1x128xf32>
    %c0_6 = arith.constant 0 : index
    %c1_7 = arith.constant 1 : index
    %c0_8 = arith.constant 0 : index
    %6 = vector.load %arg0[%c0_6, %c1_7, %c0_8] : memref<2x18x64xbf16, #tpu.memory_space<vmem>>, vector<2x16x64xbf16>
    %7 = vector.shape_cast %6 : vector<2x16x64xbf16> to vector<32x64xbf16>
    %c0_9 = arith.constant 0 : index
    %c0_10 = arith.constant 0 : index
    %8 = vector.load %arg5[%c0_9, %c0_10] : memref<64x128xbf16, #tpu.memory_space<vmem>>, vector<64x128xbf16>
    %cst = arith.constant dense<0.000000e+00> : vector<32x128xf32>
    %9 = tpu.matmul %7, %8, %cst {dimension_numbers = #tpu.dot_dimension_numbers<[1], [0], [0], [1], [0, 0, 1, 1], [], []>} : vector<32x64xbf16>, vector<64x128xbf16>, vector<32x128xf32> -> vector<32x128xf32>
    %c6 = arith.constant 6 : index
    %c0_11 = arith.constant 0 : index
    %10 = vector.load %arg3[%c6, %c0_11] : memref<7x128xf32, #tpu.memory_space<vmem>>, vector<1x128xf32>
    %11 = vector.broadcast %10 : vector<1x128xf32> to vector<32x128xf32>
    %12 = arith.addf %9, %11 : vector<32x128xf32>
    %cst_12 = arith.constant 0.000000e+00 : f32
    %13 = vector.broadcast %cst_12 : f32 to vector<32x128xf32>
    %14 = arith.maximumf %12, %13 : vector<32x128xf32>
    %c0_13 = arith.constant 0 : index
    %c0_14 = arith.constant 0 : index
    %15 = vector.load %arg6[%c0_13, %c0_14] : memref<32x128xf32, #tpu.memory_space<vmem>>, vector<32x128xf32>
    tpu.vector_store %arg6[%c0_13, %c0_14], %14 {strides = array<i32>} : memref<32x128xf32, #tpu.memory_space<vmem>>, vector<32x128xf32>,
    %c0_15 = arith.constant 0 : index
    %c0_16 = arith.constant 0 : index
    %c0_17 = arith.constant 0 : index
    %16 = vector.load %arg0[%c0_15, %c0_16, %c0_17] : memref<2x18x64xbf16, #tpu.memory_space<vmem>>, vector<2x16x64xbf16>
    %17 = vector.shape_cast %16 : vector<2x16x64xbf16> to vector<32x64xbf16>
    %c0_18 = arith.constant 0 : index
    %c0_19 = arith.constant 0 : index
    %c0_20 = arith.constant 0 : index
    %18 = vector.load %arg1[%c0_18, %c0_19, %c0_20] : memref<3x64x128xbf16, #tpu.memory_space<vmem>>, vector<1x64x128xbf16>
    %19 = vector.shape_cast %18 : vector<1x64x128xbf16> to vector<64x128xbf16>
    %cst_21 = arith.constant dense<0.000000e+00> : vector<32x128xf32>
    %20 = tpu.matmul %17, %19, %cst_21 {dimension_numbers = #tpu.dot_dimension_numbers<[1], [0], [0], [1], [0, 0, 1, 1], [], []>} : vector<32x64xbf16>, vector<64x128xbf16>, vector<32x128xf32> -> vector<32x128xf32>
    %21 = vector.broadcast %0 : vector<1x128xf32> to vector<32x128xf32>
    %22 = arith.addf %21, %20 : vector<32x128xf32>
    %c0_22 = arith.constant 0 : index
    %c1_23 = arith.constant 1 : index
    %c0_24 = arith.constant 0 : index
    %23 = vector.load %arg0[%c0_22, %c1_23, %c0_24] : memref<2x18x64xbf16, #tpu.memory_space<vmem>>, vector<2x16x64xbf16>
    %24 = vector.shape_cast %23 : vector<2x16x64xbf16> to vector<32x64xbf16>
    %c1_25 = arith.constant 1 : index
    %c0_26 = arith.constant 0 : index
    %c0_27 = arith.constant 0 : index
    %25 = vector.load %arg1[%c1_25, %c0_26, %c0_27] : memref<3x64x128xbf16, #tpu.memory_space<vmem>>, vector<1x64x128xbf16>
    %26 = vector.shape_cast %25 : vector<1x64x128xbf16> to vector<64x128xbf16>
    %cst_28 = arith.constant dense<0.000000e+00> : vector<32x128xf32>
    %27 = tpu.matmul %24, %26, %cst_28 {dimension_numbers = #tpu.dot_dimension_numbers<[1], [0], [0], [1], [0, 0, 1, 1], [], []>} : vector<32x64xbf16>, vector<64x128xbf16>, vector<32x128xf32> -> vector<32x128xf32>
    %28 = arith.addf %22, %27 : vector<32x128xf32>
    %c0_29 = arith.constant 0 : index
    %c2_30 = arith.constant 2 : index
    %c0_31 = arith.constant 0 : index
    %29 = vector.load %arg0[%c0_29, %c2_30, %c0_31] : memref<2x18x64xbf16, #tpu.memory_space<vmem>>, vector<2x16x64xbf16>
    %30 = vector.shape_cast %29 : vector<2x16x64xbf16> to vector<32x64xbf16>
    %c2_32 = arith.constant 2 : index
    %c0_33 = arith.constant 0 : index
    %c0_34 = arith.constant 0 : index
    %31 = vector.load %arg1[%c2_32, %c0_33, %c0_34] : memref<3x64x128xbf16, #tpu.memory_space<vmem>>, vector<1x64x128xbf16>
    %32 = vector.shape_cast %31 : vector<1x64x128xbf16> to vector<64x128xbf16>
    %cst_35 = arith.constant dense<0.000000e+00> : vector<32x128xf32>
    %33 = tpu.matmul %30, %32, %cst_35 {dimension_numbers = #tpu.dot_dimension_numbers<[1], [0], [0], [1], [0, 0, 1, 1], [], []>} : vector<32x64xbf16>, vector<64x128xbf16>, vector<32x128xf32> -> vector<32x128xf32>
    %34 = arith.addf %28, %33 : vector<32x128xf32>
    %cst_36 = arith.constant dense<0.000000e+00> : vector<128xf32>
    %35 = vector.multi_reduction <add>, %34, %cst_36 [0] : vector<32x128xf32> to vector<128xf32>
    %36 = vector.shape_cast %35 : vector<128xf32> to vector<1x128xf32>
    %37 = arith.mulf %34, %34 : vector<32x128xf32>
    %cst_37 = arith.constant dense<0.000000e+00> : vector<128xf32>
    %38 = vector.multi_reduction <add>, %37, %cst_37 [0] : vector<32x128xf32> to vector<128xf32>
    %39 = vector.shape_cast %38 : vector<128xf32> to vector<1x128xf32>
    %40 = tpu.concatenate %36, %39 in 0 : vector<1x128xf32>, vector<1x128xf32> -> vector<2x128xf32>
    %c0_38 = arith.constant 0 : index
    %c0_39 = arith.constant 0 : index
    %41 = vector.load %arg4[%c0_38, %c0_39] : memref<128x128xf32, #tpu.memory_space<vmem>>, vector<128x128xf32>
    %cst_40 = arith.constant dense<0.000000e+00> : vector<2x128xf32>
    %42 = tpu.matmul %40, %41, %cst_40 {dimension_numbers = #tpu.dot_dimension_numbers<[1], [0], [0], [1], [0, 0, 1, 1], [], []>} : vector<2x128xf32>, vector<128x128xf32>, vector<2x128xf32> -> vector<2x128xf32>
    %43 = vector.extract_strided_slice %42 {offsets = [0, 0], sizes = [1, 128], strides = [1, 1]} : vector<2x128xf32> to vector<1x128xf32>
    %cst_41 = arith.constant 0.001953125 : f32
    %44 = vector.broadcast %cst_41 : f32 to vector<1x128xf32>
    %45 = arith.mulf %43, %44 : vector<1x128xf32>
    %46 = vector.extract_strided_slice %42 {offsets = [1, 0], sizes = [1, 128], strides = [1, 1]} : vector<2x128xf32> to vector<1x128xf32>
    %cst_42 = arith.constant 0.001953125 : f32
    %47 = vector.broadcast %cst_42 : f32 to vector<1x128xf32>
    %48 = arith.mulf %46, %47 : vector<1x128xf32>
    %49 = arith.mulf %45, %45 : vector<1x128xf32>
    %50 = arith.subf %48, %49 : vector<1x128xf32>
    %51 = vector.broadcast %45 : vector<1x128xf32> to vector<32x128xf32>
    %52 = arith.subf %34, %51 : vector<32x128xf32>
    %cst_43 = arith.constant 9.99999974E-6 : f32
    %53 = vector.broadcast %cst_43 : f32 to vector<1x128xf32>
    %54 = arith.addf %50, %53 : vector<1x128xf32>
    %55 = math.rsqrt %54 : vector<1x128xf32>
    %56 = vector.broadcast %55 : vector<1x128xf32> to vector<32x128xf32>
    %57 = arith.mulf %52, %56 : vector<32x128xf32>
    %58 = vector.broadcast %1 : vector<1x128xf32> to vector<32x128xf32>
    %59 = arith.mulf %57, %58 : vector<32x128xf32>
    %60 = vector.broadcast %2 : vector<1x128xf32> to vector<32x128xf32>
    %61 = arith.addf %59, %60 : vector<32x128xf32>
    %cst_44 = arith.constant 0.000000e+00 : f32
    %62 = vector.broadcast %cst_44 : f32 to vector<32x128xf32>
    %63 = arith.maximumf %61, %62 : vector<32x128xf32>
    %cst_45 = arith.constant 0.000000e+00 : bf16
    %64 = vector.broadcast %cst_45 : bf16 to vector<2x1x128xbf16>
    %c0_46 = arith.constant 0 : index
    %c0_47 = arith.constant 0 : index
    %c0_48 = arith.constant 0 : index
    %65 = vector.load %arg8[%c0_46, %c0_47, %c0_48] : memref<2x18x128xbf16, #tpu.memory_space<vmem>>, vector<2x1x128xbf16>
    tpu.vector_store %arg8[%c0_46, %c0_47, %c0_48], %64 {strides = array<i32>} : memref<2x18x128xbf16, #tpu.memory_space<vmem>>, vector<2x1x128xbf16>,
    %cst_49 = arith.constant 0.000000e+00 : bf16
    %66 = vector.broadcast %cst_49 : bf16 to vector<2x1x128xbf16>
    %c0_50 = arith.constant 0 : index
    %c17 = arith.constant 17 : index
    %c0_51 = arith.constant 0 : index
    %67 = vector.load %arg8[%c0_50, %c17, %c0_51] : memref<2x18x128xbf16, #tpu.memory_space<vmem>>, vector<2x1x128xbf16>
    tpu.vector_store %arg8[%c0_50, %c17, %c0_51], %66 {strides = array<i32>} : memref<2x18x128xbf16, #tpu.memory_space<vmem>>, vector<2x1x128xbf16>,
    %68 = arith.truncf %63 : vector<32x128xf32> to vector<32x128xbf16>
    %69 = vector.shape_cast %68 : vector<32x128xbf16> to vector<2x16x128xbf16>
    %c0_52 = arith.constant 0 : index
    %c1_53 = arith.constant 1 : index
    %c0_54 = arith.constant 0 : index
    %70 = vector.load %arg8[%c0_52, %c1_53, %c0_54] : memref<2x18x128xbf16, #tpu.memory_space<vmem>>, vector<2x16x128xbf16>
    tpu.vector_store %arg8[%c0_52, %c1_53, %c0_54], %69 {strides = array<i32>} : memref<2x18x128xbf16, #tpu.memory_space<vmem>>, vector<2x16x128xbf16>,
    %c0_55 = arith.constant 0 : index
    %c0_56 = arith.constant 0 : index
    %c0_57 = arith.constant 0 : index
    %71 = vector.load %arg8[%c0_55, %c0_56, %c0_57] : memref<2x18x128xbf16, #tpu.memory_space<vmem>>, vector<2x16x128xbf16>
    %72 = vector.shape_cast %71 : vector<2x16x128xbf16> to vector<32x128xbf16>
    %c0_58 = arith.constant 0 : index
    %c0_59 = arith.constant 0 : index
    %c0_60 = arith.constant 0 : index
    %73 = vector.load %arg2[%c0_58, %c0_59, %c0_60] : memref<3x128x128xbf16, #tpu.memory_space<vmem>>, vector<1x128x128xbf16>
    %74 = vector.shape_cast %73 : vector<1x128x128xbf16> to vector<128x128xbf16>
    %cst_61 = arith.constant dense<0.000000e+00> : vector<32x128xf32>
    %75 = tpu.matmul %72, %74, %cst_61 {dimension_numbers = #tpu.dot_dimension_numbers<[1], [0], [0], [1], [0, 0, 1, 1], [], []>} : vector<32x128xbf16>, vector<128x128xbf16>, vector<32x128xf32> -> vector<32x128xf32>
    %76 = vector.broadcast %3 : vector<1x128xf32> to vector<32x128xf32>
    %77 = arith.addf %76, %75 : vector<32x128xf32>
    %c0_62 = arith.constant 0 : index
    %c1_63 = arith.constant 1 : index
    %c0_64 = arith.constant 0 : index
    %78 = vector.load %arg8[%c0_62, %c1_63, %c0_64] : memref<2x18x128xbf16, #tpu.memory_space<vmem>>, vector<2x16x128xbf16>
    %79 = vector.shape_cast %78 : vector<2x16x128xbf16> to vector<32x128xbf16>
    %c1_65 = arith.constant 1 : index
    %c0_66 = arith.constant 0 : index
    %c0_67 = arith.constant 0 : index
    %80 = vector.load %arg2[%c1_65, %c0_66, %c0_67] : memref<3x128x128xbf16, #tpu.memory_space<vmem>>, vector<1x128x128xbf16>
    %81 = vector.shape_cast %80 : vector<1x128x128xbf16> to vector<128x128xbf16>
    %cst_68 = arith.constant dense<0.000000e+00> : vector<32x128xf32>
    %82 = tpu.matmul %79, %81, %cst_68 {dimension_numbers = #tpu.dot_dimension_numbers<[1], [0], [0], [1], [0, 0, 1, 1], [], []>} : vector<32x128xbf16>, vector<128x128xbf16>, vector<32x128xf32> -> vector<32x128xf32>
    %83 = arith.addf %77, %82 : vector<32x128xf32>
    %c0_69 = arith.constant 0 : index
    %c2_70 = arith.constant 2 : index
    %c0_71 = arith.constant 0 : index
    %84 = vector.load %arg8[%c0_69, %c2_70, %c0_71] : memref<2x18x128xbf16, #tpu.memory_space<vmem>>, vector<2x16x128xbf16>
    %85 = vector.shape_cast %84 : vector<2x16x128xbf16> to vector<32x128xbf16>
    %c2_72 = arith.constant 2 : index
    %c0_73 = arith.constant 0 : index
    %c0_74 = arith.constant 0 : index
    %86 = vector.load %arg2[%c2_72, %c0_73, %c0_74] : memref<3x128x128xbf16, #tpu.memory_space<vmem>>, vector<1x128x128xbf16>
    %87 = vector.shape_cast %86 : vector<1x128x128xbf16> to vector<128x128xbf16>
    %cst_75 = arith.constant dense<0.000000e+00> : vector<32x128xf32>
    %88 = tpu.matmul %85, %87, %cst_75 {dimension_numbers = #tpu.dot_dimension_numbers<[1], [0], [0], [1], [0, 0, 1, 1], [], []>} : vector<32x128xbf16>, vector<128x128xbf16>, vector<32x128xf32> -> vector<32x128xf32>
    %89 = arith.addf %83, %88 : vector<32x128xf32>
    %cst_76 = arith.constant dense<0.000000e+00> : vector<128xf32>
    %90 = vector.multi_reduction <add>, %89, %cst_76 [0] : vector<32x128xf32> to vector<128xf32>
    %91 = vector.shape_cast %90 : vector<128xf32> to vector<1x128xf32>
    %92 = arith.mulf %89, %89 : vector<32x128xf32>
    %cst_77 = arith.constant dense<0.000000e+00> : vector<128xf32>
    %93 = vector.multi_reduction <add>, %92, %cst_77 [0] : vector<32x128xf32> to vector<128xf32>
    %94 = vector.shape_cast %93 : vector<128xf32> to vector<1x128xf32>
    %95 = tpu.concatenate %91, %94 in 0 : vector<1x128xf32>, vector<1x128xf32> -> vector<2x128xf32>
    %c0_78 = arith.constant 0 : index
    %c0_79 = arith.constant 0 : index
    %96 = vector.load %arg4[%c0_78, %c0_79] : memref<128x128xf32, #tpu.memory_space<vmem>>, vector<128x128xf32>
    %cst_80 = arith.constant dense<0.000000e+00> : vector<2x128xf32>
    %97 = tpu.matmul %95, %96, %cst_80 {dimension_numbers = #tpu.dot_dimension_numbers<[1], [0], [0], [1], [0, 0, 1, 1], [], []>} : vector<2x128xf32>, vector<128x128xf32>, vector<2x128xf32> -> vector<2x128xf32>
    %98 = vector.extract_strided_slice %97 {offsets = [0, 0], sizes = [1, 128], strides = [1, 1]} : vector<2x128xf32> to vector<1x128xf32>
    %cst_81 = arith.constant 0.001953125 : f32
    %99 = vector.broadcast %cst_81 : f32 to vector<1x128xf32>
    %100 = arith.mulf %98, %99 : vector<1x128xf32>
    %101 = vector.extract_strided_slice %97 {offsets = [1, 0], sizes = [1, 128], strides = [1, 1]} : vector<2x128xf32> to vector<1x128xf32>
    %cst_82 = arith.constant 0.001953125 : f32
    %102 = vector.broadcast %cst_82 : f32 to vector<1x128xf32>
    %103 = arith.mulf %101, %102 : vector<1x128xf32>
    %104 = arith.mulf %100, %100 : vector<1x128xf32>
    %105 = arith.subf %103, %104 : vector<1x128xf32>
    %106 = vector.broadcast %100 : vector<1x128xf32> to vector<32x128xf32>
    %107 = arith.subf %89, %106 : vector<32x128xf32>
    %cst_83 = arith.constant 9.99999974E-6 : f32
    %108 = vector.broadcast %cst_83 : f32 to vector<1x128xf32>
    %109 = arith.addf %105, %108 : vector<1x128xf32>
    %110 = math.rsqrt %109 : vector<1x128xf32>
    %111 = vector.broadcast %110 : vector<1x128xf32> to vector<32x128xf32>
    %112 = arith.mulf %107, %111 : vector<32x128xf32>
    %113 = vector.broadcast %4 : vector<1x128xf32> to vector<32x128xf32>
    %114 = arith.mulf %112, %113 : vector<32x128xf32>
    %115 = vector.broadcast %5 : vector<1x128xf32> to vector<32x128xf32>
    %116 = arith.addf %114, %115 : vector<32x128xf32>
    %117 = arith.addf %116, %12 : vector<32x128xf32>
    %c0_84 = arith.constant 0 : index
    %c0_85 = arith.constant 0 : index
    %118 = vector.load %arg7[%c0_84, %c0_85] : memref<32x128xf32, #tpu.memory_space<vmem>>, vector<32x128xf32>
    tpu.vector_store %arg7[%c0_84, %c0_85], %117 {strides = array<i32>} : memref<32x128xf32, #tpu.memory_space<vmem>>, vector<32x128xf32>,
    return
  }
}

</mosaic_0001>

<llo_original>
// kernel: tpu_custom_call.1
$region0: #{tpu_custom_call.1}
  #allocation0 [shape = 'u32[]', space=smem, size = 0x4, offset = 0x4, fixed_abs, tag = 'smem constant byte address 0x4 - core index']
  #allocation1 [shape = 'u32[144,128]{1,0:T(1,128)}', space=vmem, size = 0x12000, scoped, tag = 'internal scratch']
  #allocation2 [shape = 'bf16[2,18,128]{2,1,0:T(8,128)(2,1)}', space=vmem, size = 0x3000, scoped, tag = 'scratch operand']
  %s0 = inlined_call_operand.vmem [shape: bf16[2,18,64], index: 0, kind: input, shape index: {}]
  %s1 = inlined_call_operand.hbm [shape: bf16[3,64,128], index: 1, kind: input, shape index: {}]
  %s2 = inlined_call_operand.hbm [shape: bf16[3,128,128], index: 2, kind: input, shape index: {}]
  %s3 = inlined_call_operand.vmem [shape: f32[7,128], index: 3, kind: input, shape index: {}]
  %s4 = inlined_call_operand.hbm [shape: f32[128,128], index: 4, kind: input, shape index: {}]
  %s5 = inlined_call_operand.vmem [shape: bf16[64,128], index: 5, kind: input, shape index: {}]
  %s6 = inlined_call_operand.hbm [shape: f32[32,128], index: 6, kind: output, shape index: {0}]
  %s7 = inlined_call_operand.hbm [shape: f32[32,128], index: 7, kind: output, shape index: {1}]
  %8 = xla_tuple %s6, %s7
  %s9 = sld [smem:[#allocation0]]
  $region54: #{tpu_custom_call.1} parent=0
    _
  %s11 = ssub.s32 1, %s9
  %s12 = scalar_select 0, %s11, %s9
  $region1: #{tpu_custom_call.1} parent=0
    #allocation3 [shape = 'u8[49152]{0}', space=vmem, size = 0xc000, scoped, tag = 'input window, operand 1, single buffered']
    #allocation4 [shape = 's32[1]{0}', space=sflag, size = 0x4, scoped, tag = 'scoped memory for tpu_custom_call.1']
    #allocation5 [shape = 's32[1]{0}', space=sflag, size = 0x4, scoped, tag = 'scoped memory for tpu_custom_call.1']
    #allocation6 [shape = 'u8[98304]{0}', space=vmem, size = 0x18000, scoped, tag = 'input window, operand 2, single buffered']
    #allocation7 [shape = 's32[1]{0}', space=sflag, size = 0x4, scoped, tag = 'scoped memory for tpu_custom_call.1']
    #allocation8 [shape = 'u8[65536]{0}', space=vmem, size = 0x10000, scoped, tag = 'input window, operand 4, single buffered']
    #allocation9 [shape = 'u8[16384]{0}', space=vmem, size = 0x4000, scoped, tag = 'output window, operand 0, single buffered']
    #allocation10 [shape = 'u8[16384]{0}', space=vmem, size = 0x4000, scoped, tag = 'output window, operand 1, single buffered']
    #allocation11 [shape = 's32[1]{0}', space=sflag, size = 0x4, scoped, tag = 'scoped memory for tpu_custom_call.1']
    %13 = vsyncpa [#allocation4], 0
    %14 = vsyncpa [#allocation7], 0
    %15 = vsyncpa [#allocation5], 0
    %16 = vsyncpa [#allocation11], 0
    // Predicated region
    $region2: #{tpu_custom_call.1} parent=1 // pred_check
      _
    $region3: #{tpu_custom_call.1} parent=1 // pred_check_branch
      %18 = sbr.rel (0) target = $region5
    $region4: #{tpu_custom_call.1} parent=1 // pred_region
      _
    $region5: #{tpu_custom_call.1} parent=1 // pred_fallthru
      _
    // Predicated region
    $region6: #{tpu_custom_call.1} parent=1 // pred_check
      _
    $region7: #{tpu_custom_call.1} parent=1 // pred_check_branch
      %20 = sbr.rel (0) target = $region9
    $region8: #{tpu_custom_call.1} parent=1 // pred_region
      %s22 = ssub.s32 1536, 1536
      %23 = vsyncadd [#allocation4], %s22
      %s24 = sshll.u32 [#allocation3], 4
      %s25 = int_to_ptr.vmem [resolvable:$true] %s24
      %30 = dma.hbm_to_vmem [thread:$0]  %s1, 1536, %s25, [#allocation4], 64, 64, 4
    $region9: #{tpu_custom_call.1} parent=1 // pred_fallthru
      _
    // Predicated region
    $region10: #{tpu_custom_call.1} parent=1 // pred_check
      _
    $region11: #{tpu_custom_call.1} parent=1 // pred_check_branch
      %32 = sbr.rel (0) target = $region13
    $region12: #{tpu_custom_call.1} parent=1 // pred_region
      %s34 = ssub.s32 3072, 3072
      %35 = vsyncadd [#allocation7], %s34
      %s36 = sshll.u32 [#allocation6], 4
      %s37 = int_to_ptr.vmem [resolvable:$true] %s36
      %42 = dma.hbm_to_vmem [thread:$0]  %s2, 3072, %s37, [#allocation7], 64, 64, 4
    $region13: #{tpu_custom_call.1} parent=1 // pred_fallthru
      _
    // Predicated region
    $region14: #{tpu_custom_call.1} parent=1 // pred_check
      _
    $region15: #{tpu_custom_call.1} parent=1 // pred_check_branch
      %44 = sbr.rel (0) target = $region17
    $region16: #{tpu_custom_call.1} parent=1 // pred_region
      _
    $region17: #{tpu_custom_call.1} parent=1 // pred_fallthru
      _
    // Predicated region
    $region18: #{tpu_custom_call.1} parent=1 // pred_check
      _
    $region19: #{tpu_custom_call.1} parent=1 // pred_check_branch
      %46 = sbr.rel (0) target = $region21
    $region20: #{tpu_custom_call.1} parent=1 // pred_region
      %s48 = ssub.s32 2048, 2048
      %49 = vsyncadd [#allocation7], %s48
      %s50 = sshll.u32 [#allocation8], 4
      %s51 = int_to_ptr.vmem [resolvable:$true] %s50
      %56 = dma.hbm_to_vmem [thread:$0]  %s4, 2048, %s51, [#allocation7], 128, 128, 8
    $region21: #{tpu_custom_call.1} parent=1 // pred_fallthru
      _
    // Predicated region
    $region22: #{tpu_custom_call.1} parent=1 // pred_check
      _
    $region23: #{tpu_custom_call.1} parent=1 // pred_check_branch
      %58 = sbr.rel (0) target = $region25
    $region24: #{tpu_custom_call.1} parent=1 // pred_region
      _
    $region25: #{tpu_custom_call.1} parent=1 // pred_fallthru
      _
    // Predicated region
    $region26: #{tpu_custom_call.1} parent=1 // pred_check
      _
    $region27: #{tpu_custom_call.1} parent=1 // pred_check_branch
      %60 = sbr.rel (0) target = $region29
    $region28: #{tpu_custom_call.1} parent=1 // pred_region
      %61 = dma.done [#allocation4], 1536
    $region29: #{tpu_custom_call.1} parent=1 // pred_fallthru
      _
    // Predicated region
    $region30: #{tpu_custom_call.1} parent=1 // pred_check
      _
    $region31: #{tpu_custom_call.1} parent=1 // pred_check_branch
      %63 = sbr.rel (0) target = $region33
    $region32: #{tpu_custom_call.1} parent=1 // pred_region
      %64 = dma.done [#allocation7], 3072
    $region33: #{tpu_custom_call.1} parent=1 // pred_fallthru
      _
    // Predicated region
    $region34: #{tpu_custom_call.1} parent=1 // pred_check
      _
    $region35: #{tpu_custom_call.1} parent=1 // pred_check_branch
      %66 = sbr.rel (0) target = $region37
    $region36: #{tpu_custom_call.1} parent=1 // pred_region
      %67 = dma.done [#allocation7], 2048
    $region37: #{tpu_custom_call.1} parent=1 // pred_fallthru
      _
    %v69 = vld [vmem:[%s3] sm:$0x1]
    %v70 = vld [vmem:[%s3 + $0x1] sm:$0x1]
    %v71 = vld [vmem:[%s3 + $0x2] sm:$0x1]
    %v72 = vld [vmem:[%s3 + $0x3] sm:$0x1]
    %v73 = vld [vmem:[%s3 + $0x4] sm:$0x1]
    %v74 = vld [vmem:[%s3 + $0x5] sm:$0x1]
    %v75 = vld [vmem:[%s0] sm:$0xf]
    %v76 = vld [vmem:[%s0 + $0x4] sm:$0xf]
    %v77 = vld [vmem:[%s0 + $0x8] sm:$0x1]
    %v78 = vld [vmem:[%s0 + $0xc] sm:$0xf]
    %v79 = vld [vmem:[%s0 + $0x10] sm:$0xf]
    %v80 = vld [vmem:[%s0 + $0x14] sm:$0x1]
    %vm81 = vsmask.f32 3328
    %vm82 = vsmask.f32 7440
    %vm83 = vmor %vm81, %vm82
    %v85 = vshrl.u32 %v75, 16
    %v87 = vrot.slane %v85, 4
    %v88 = vshll.u32 %v75, 16
    %v90 = vrot.slane %v88, 5
    %v91 = vor.u32 %v87, %v90
    %v92 = vrot.slane %v91, 4
    %v94 = vshll.u32 %v76, 16
    %v96 = vrot.slane %v94, 5
    %v97 = vsel %vm83, %v92, %v96
    %v98 = vshrl.u32 %v76, 16
    %v100 = vrot.slane %v98, 4
    %v101 = vor.u32 %v100, %v96
    %v102 = vrot.slane %v101, 4
    %v104 = vshll.u32 %v77, 16
    %v106 = vrot.slane %v104, 5
    %v107 = vsel %vm83, %v102, %v106
    %v109 = vshrl.u32 %v78, 16
    %v111 = vrot.slane %v109, 4
    %v112 = vshll.u32 %v78, 16
    %v114 = vrot.slane %v112, 5
    %v115 = vor.u32 %v111, %v114
    %v116 = vrot.slane %v115, 4
    %v118 = vshll.u32 %v79, 16
    %v120 = vrot.slane %v118, 5
    %v121 = vsel %vm83, %v116, %v120
    %v122 = vshrl.u32 %v79, 16
    %v124 = vrot.slane %v122, 4
    %v125 = vor.u32 %v124, %v120
    %v126 = vrot.slane %v125, 4
    %v128 = vshll.u32 %v80, 16
    %v130 = vrot.slane %v128, 5
    %v131 = vsel %vm83, %v126, %v130
    %v132 = vld [vmem:[%s5] sm:$0xf]
    %v133 = vld [vmem:[%s5 + $0x4] sm:$0xf]
    %v134 = vld [vmem:[%s5 + $0x8] sm:$0xf]
    %v135 = vld [vmem:[%s5 + $0xc] sm:$0xf]
    %v136 = vld [vmem:[%s5 + $0x10] sm:$0xf]
    %v137 = vld [vmem:[%s5 + $0x14] sm:$0xf]
    %v138 = vld [vmem:[%s5 + $0x18] sm:$0xf]
    %v139 = vld [vmem:[%s5 + $0x1c] sm:$0xf]
    %v140 = vld [vmem:[%s3 + $0x6] sm:$0x1]
    %v141 = vlaneseq
    %v142 = vshrl.u32 %v141, 7
    %v143 = vsub.s32 0, %v142
    %v144 = vrot.slane %v140, %v143
    %v145 = vunpack.c.l.b16 %v97
    %v146 = vunpack.c.l.b16 %v107
    %v147 = vunpack.c.l.b16 %v121
    %v148 = vunpack.c.l.b16 %v131
    %v149 = vpack.c.b16 %v146, %v145
    %v150 = vpack.c.b16 %v148, %v147
    %v159 = vunpack.c.l.b16 %v132
    %v160 = vunpack.c.l.b16 %v133
    %v161 = vunpack.c.l.b16 %v134
    %v162 = vunpack.c.l.b16 %v135
    %v163 = vunpack.c.l.b16 %v136
    %v164 = vunpack.c.l.b16 %v137
    %v165 = vunpack.c.l.b16 %v138
    %v166 = vunpack.c.l.b16 %v139
    %v167 = vpack.c.b16 %v160, %v159
    %v168 = vpack.c.b16 %v162, %v161
    %v169 = vpack.c.b16 %v164, %v163
    %v170 = vpack.c.b16 %v166, %v165
    %vm175 = vcmask 523264
    %v177 = vsel %vm175, %v149, 0
    %v180 = vsel %vm175, %v150, 0
    %182 = vmatprep.subr.bf16.mxu0 0
    %183 = vmatpush1.bf16.msra.mxu0 0
    %184 = vmatprep.subr.bf16.mxu0 0
    %185 = vmatpush1.bf16.msra.mxu0 0
    %186 = vmatprep.subr.bf16.mxu0 0
    %187 = vmatpush1.bf16.msra.mxu0 0
    %188 = vmatprep.subr.bf16.mxu0 0
    %189 = vmatpush1.bf16.msra.mxu0 0
    %190 = vmatprep.subr.bf16.mxu0 0
    %191 = vmatpush1.bf16.msra.mxu0 %v170
    %192 = vmatprep.subr.bf16.mxu0 0
    %193 = vmatpush1.bf16.msra.mxu0 %v169
    %194 = vmatprep.subr.bf16.mxu0 0
    %195 = vmatpush1.bf16.msra.mxu0 %v168
    %196 = vmatprep.subr.bf16.mxu0 0
    %197 = vmatpush1.bf16.msra.mxu0 %v167
    %198 = vmatprep.subr.bf16.mxu0 0
    %199 = vmatpush2.bf16.msra.mxu0 0
    %200 = vmatprep.subr.bf16.mxu0 0
    %201 = vmatpush2.bf16.msra.mxu0 0
    %202 = vmatprep.subr.bf16.mxu0 0
    %203 = vmatpush2.bf16.msra.mxu0 0
    %204 = vmatprep.subr.bf16.mxu0 0
    %205 = vmatpush2.bf16.msra.mxu0 0
    %206 = vmatprep.subr.bf16.mxu0 0
    %207 = vmatpush2.bf16.msra.mxu0 0
    %208 = vmatprep.subr.bf16.mxu0 0
    %209 = vmatpush2.bf16.msra.mxu0 0
    %210 = vmatprep.subr.bf16.mxu0 0
    %211 = vmatpush2.bf16.msra.mxu0 0
    %212 = vmatprep.subr.bf16.mxu0 0
    %213 = vmatpush2.bf16.msra.mxu0 0
    %214 = vmatprep.mubr.bf16.mxu0 0
    %215 = vmatmul.mubr.bf16.gmra.mxu0 %v177
    %v216 = vpop.f32.mrf.mxu0
    %v217 = vadd.f32 %v144, %v216
    %v218 = vpop.f32.mrf.mxu0
    %v219 = vpop.f32.mrf.mxu0
    %v220 = vadd.f32 %v144, %v219
    %v221 = vpop.f32.mrf.mxu0
    %222 = vmatprep.mubr.bf16.mxu0 0
    %223 = vmatmul.mubr.bf16.gmra.mxu0 %v180
    %v224 = vpop.f32.mrf.mxu0
    %v225 = vadd.f32 %v144, %v224
    %v226 = vpop.f32.mrf.mxu0
    %v227 = vpop.f32.mrf.mxu0
    %v228 = vadd.f32 %v144, %v227
    %v229 = vpop.f32.mrf.mxu0
    %230 = vdwg.mxu0
    %v231 = vmax.f32 %v217, 0.0
    %v232 = vmax.f32 %v220, 0.0
    %v233 = vmax.f32 %v225, 0.0
    %v234 = vmax.f32 %v228, 0.0
    %235 = vst [vmem:[#allocation9] sm:$0xff] %v231
    %236 = vst [vmem:[#allocation9 + $0x8] sm:$0xff] %v232
    %237 = vst [vmem:[#allocation9 + $0x10] sm:$0xff] %v233
    %238 = vst [vmem:[#allocation9 + $0x18] sm:$0xff] %v234
    %v239 = vld [vmem:[%s0] sm:$0xf]
    %v240 = vld [vmem:[%s0 + $0x4] sm:$0xf]
    %v241 = vld [vmem:[%s0 + $0xc] sm:$0xf]
    %v242 = vld [vmem:[%s0 + $0x10] sm:$0xf]
    %v243 = vld [vmem:[#allocation3] sm:$0xf]
    %v244 = vld [vmem:[#allocation3 + $0x4] sm:$0xf]
    %v245 = vld [vmem:[#allocation3 + $0x8] sm:$0xf]
    %v246 = vld [vmem:[#allocation3 + $0xc] sm:$0xf]
    %v247 = vld [vmem:[#allocation3 + $0x10] sm:$0xf]
    %v248 = vld [vmem:[#allocation3 + $0x14] sm:$0xf]
    %v249 = vld [vmem:[#allocation3 + $0x18] sm:$0xf]
    %v250 = vld [vmem:[#allocation3 + $0x1c] sm:$0xf]
    %v255 = vunpack.c.l.b16 %v239
    %v256 = vunpack.c.l.b16 %v240
    %v257 = vunpack.c.l.b16 %v241
    %v258 = vunpack.c.l.b16 %v242
    %v259 = vpack.c.b16 %v256, %v255
    %v260 = vpack.c.b16 %v258, %v257
    %v269 = vunpack.c.l.b16 %v243
    %v270 = vunpack.c.l.b16 %v244
    %v271 = vunpack.c.l.b16 %v245
    %v272 = vunpack.c.l.b16 %v246
    %v273 = vunpack.c.l.b16 %v247
    %v274 = vunpack.c.l.b16 %v248
    %v275 = vunpack.c.l.b16 %v249
    %v276 = vunpack.c.l.b16 %v250
    %v277 = vpack.c.b16 %v270, %v269
    %v278 = vpack.c.b16 %v272, %v271
    %v279 = vpack.c.b16 %v274, %v273
    %v280 = vpack.c.b16 %v276, %v275
    %v286 = vsel %vm175, %v259, 0
    %v289 = vsel %vm175, %v260, 0
    %291 = vmatprep.subr.bf16.mxu0 0
    %292 = vmatpush1.bf16.msra.mxu0 0
    %293 = vmatprep.subr.bf16.mxu0 0
    %294 = vmatpush1.bf16.msra.mxu0 0
    %295 = vmatprep.subr.bf16.mxu0 0
    %296 = vmatpush1.bf16.msra.mxu0 0
    %297 = vmatprep.subr.bf16.mxu0 0
    %298 = vmatpush1.bf16.msra.mxu0 0
    %299 = vmatprep.subr.bf16.mxu0 0
    %300 = vmatpush1.bf16.msra.mxu0 %v280
    %301 = vmatprep.subr.bf16.mxu0 0
    %302 = vmatpush1.bf16.msra.mxu0 %v279
    %303 = vmatprep.subr.bf16.mxu0 0
    %304 = vmatpush1.bf16.msra.mxu0 %v278
    %305 = vmatprep.subr.bf16.mxu0 0
    %306 = vmatpush1.bf16.msra.mxu0 %v277
    %307 = vmatprep.subr.bf16.mxu0 0
    %308 = vmatpush2.bf16.msra.mxu0 0
    %309 = vmatprep.subr.bf16.mxu0 0
    %310 = vmatpush2.bf16.msra.mxu0 0
    %311 = vmatprep.subr.bf16.mxu0 0
    %312 = vmatpush2.bf16.msra.mxu0 0
    %313 = vmatprep.subr.bf16.mxu0 0
    %314 = vmatpush2.bf16.msra.mxu0 0
    %315 = vmatprep.subr.bf16.mxu0 0
    %316 = vmatpush2.bf16.msra.mxu0 0
    %317 = vmatprep.subr.bf16.mxu0 0
    %318 = vmatpush2.bf16.msra.mxu0 0
    %319 = vmatprep.subr.bf16.mxu0 0
    %320 = vmatpush2.bf16.msra.mxu0 0
    %321 = vmatprep.subr.bf16.mxu0 0
    %322 = vmatpush2.bf16.msra.mxu0 0
    %323 = vmatprep.mubr.bf16.mxu0 0
    %324 = vmatmul.mubr.bf16.gmra.mxu0 %v286
    %v325 = vpop.f32.mrf.mxu0
    %v326 = vadd.f32 0.0, %v325
    %v327 = vpop.f32.mrf.mxu0
    %v328 = vpop.f32.mrf.mxu0
    %v329 = vadd.f32 0.0, %v328
    %v330 = vpop.f32.mrf.mxu0
    %331 = vmatprep.mubr.bf16.mxu0 0
    %332 = vmatmul.mubr.bf16.gmra.mxu0 %v289
    %v333 = vpop.f32.mrf.mxu0
    %v334 = vadd.f32 0.0, %v333
    %v335 = vpop.f32.mrf.mxu0
    %v336 = vpop.f32.mrf.mxu0
    %v337 = vadd.f32 0.0, %v336
    %v338 = vpop.f32.mrf.mxu0
    %339 = vdwg.mxu0
    %v340 = vlaneseq
    %v341 = vshrl.u32 %v340, 7
    %v342 = vsub.s32 0, %v341
    %v343 = vrot.slane %v69, %v342
    %v344 = vadd.f32 %v343, %v326
    %v345 = vadd.f32 %v343, %v329
    %v346 = vadd.f32 %v343, %v334
    %v347 = vadd.f32 %v343, %v337
    %v348 = vld [vmem:[%s0] sm:$0xf]
    %v349 = vld [vmem:[%s0 + $0x4] sm:$0xf]
    %v350 = vld [vmem:[%s0 + $0x8] sm:$0x1]
    %v351 = vld [vmem:[%s0 + $0xc] sm:$0xf]
    %v352 = vld [vmem:[%s0 + $0x10] sm:$0xf]
    %v353 = vld [vmem:[%s0 + $0x14] sm:$0x1]
    %v355 = vshrl.u32 %v348, 16
    %v357 = vrot.slane %v355, 4
    %v358 = vshll.u32 %v348, 16
    %v360 = vrot.slane %v358, 5
    %v361 = vor.u32 %v357, %v360
    %v362 = vrot.slane %v361, 4
    %v364 = vshll.u32 %v349, 16
    %v366 = vrot.slane %v364, 5
    %v367 = vsel %vm83, %v362, %v366
    %v368 = vshrl.u32 %v349, 16
    %v370 = vrot.slane %v368, 4
    %v371 = vor.u32 %v370, %v366
    %v372 = vrot.slane %v371, 4
    %v374 = vshll.u32 %v350, 16
    %v376 = vrot.slane %v374, 5
    %v377 = vsel %vm83, %v372, %v376
    %v379 = vshrl.u32 %v351, 16
    %v381 = vrot.slane %v379, 4
    %v382 = vshll.u32 %v351, 16
    %v384 = vrot.slane %v382, 5
    %v385 = vor.u32 %v381, %v384
    %v386 = vrot.slane %v385, 4
    %v388 = vshll.u32 %v352, 16
    %v390 = vrot.slane %v388, 5
    %v391 = vsel %vm83, %v386, %v390
    %v392 = vshrl.u32 %v352, 16
    %v394 = vrot.slane %v392, 4
    %v395 = vor.u32 %v394, %v390
    %v396 = vrot.slane %v395, 4
    %v398 = vshll.u32 %v353, 16
    %v400 = vrot.slane %v398, 5
    %v401 = vsel %vm83, %v396, %v400
    %s402 = scalar_lea.vmem [#allocation3], 32
    %v403 = vld [vmem:[%s402] sm:$0xf]
    %v404 = vld [vmem:[%s402 + $0x4] sm:$0xf]
    %v405 = vld [vmem:[%s402 + $0x8] sm:$0xf]
    %v406 = vld [vmem:[%s402 + $0xc] sm:$0xf]
    %v407 = vld [vmem:[%s402 + $0x10] sm:$0xf]
    %v408 = vld [vmem:[%s402 + $0x14] sm:$0xf]
    %v409 = vld [vmem:[%s402 + $0x18] sm:$0xf]
    %v410 = vld [vmem:[%s402 + $0x1c] sm:$0xf]
    %v411 = vunpack.c.l.b16 %v367
    %v412 = vunpack.c.l.b16 %v377
    %v413 = vunpack.c.l.b16 %v391
    %v414 = vunpack.c.l.b16 %v401
    %v415 = vpack.c.b16 %v412, %v411
    %v416 = vpack.c.b16 %v414, %v413
    %v425 = vunpack.c.l.b16 %v403
    %v426 = vunpack.c.l.b16 %v404
    %v427 = vunpack.c.l.b16 %v405
    %v428 = vunpack.c.l.b16 %v406
    %v429 = vunpack.c.l.b16 %v407
    %v430 = vunpack.c.l.b16 %v408
    %v431 = vunpack.c.l.b16 %v409
    %v432 = vunpack.c.l.b16 %v410
    %v433 = vpack.c.b16 %v426, %v425
    %v434 = vpack.c.b16 %v428, %v427
    %v435 = vpack.c.b16 %v430, %v429
    %v436 = vpack.c.b16 %v432, %v431
    %v442 = vsel %vm175, %v415, 0
    %v445 = vsel %vm175, %v416, 0
    %447 = vmatprep.subr.bf16.mxu0 0
    %448 = vmatpush1.bf16.msra.mxu0 0
    %449 = vmatprep.subr.bf16.mxu0 0
    %450 = vmatpush1.bf16.msra.mxu0 0
    %451 = vmatprep.subr.bf16.mxu0 0
    %452 = vmatpush1.bf16.msra.mxu0 0
    %453 = vmatprep.subr.bf16.mxu0 0
    %454 = vmatpush1.bf16.msra.mxu0 0
    %455 = vmatprep.subr.bf16.mxu0 0
    %456 = vmatpush1.bf16.msra.mxu0 %v436
    %457 = vmatprep.subr.bf16.mxu0 0
    %458 = vmatpush1.bf16.msra.mxu0 %v435
    %459 = vmatprep.subr.bf16.mxu0 0
    %460 = vmatpush1.bf16.msra.mxu0 %v434
    %461 = vmatprep.subr.bf16.mxu0 0
    %462 = vmatpush1.bf16.msra.mxu0 %v433
    %463 = vmatprep.subr.bf16.mxu0 0
    %464 = vmatpush2.bf16.msra.mxu0 0
    %465 = vmatprep.subr.bf16.mxu0 0
    %466 = vmatpush2.bf16.msra.mxu0 0
    %467 = vmatprep.subr.bf16.mxu0 0
    %468 = vmatpush2.bf16.msra.mxu0 0
    %469 = vmatprep.subr.bf16.mxu0 0
    %470 = vmatpush2.bf16.msra.mxu0 0
    %471 = vmatprep.subr.bf16.mxu0 0
    %472 = vmatpush2.bf16.msra.mxu0 0
    %473 = vmatprep.subr.bf16.mxu0 0
    %474 = vmatpush2.bf16.msra.mxu0 0
    %475 = vmatprep.subr.bf16.mxu0 0
    %476 = vmatpush2.bf16.msra.mxu0 0
    %477 = vmatprep.subr.bf16.mxu0 0
    %478 = vmatpush2.bf16.msra.mxu0 0
    %479 = vmatprep.mubr.bf16.mxu0 0
    %480 = vmatmul.mubr.bf16.gmra.mxu0 %v442
    %v481 = vpop.f32.mrf.mxu0
    %v482 = vadd.f32 0.0, %v481
    %v483 = vpop.f32.mrf.mxu0
    %v484 = vpop.f32.mrf.mxu0
    %v485 = vadd.f32 0.0, %v484
    %v486 = vpop.f32.mrf.mxu0
    %487 = vmatprep.mubr.bf16.mxu0 0
    %488 = vmatmul.mubr.bf16.gmra.mxu0 %v445
    %v489 = vpop.f32.mrf.mxu0
    %v490 = vadd.f32 0.0, %v489
    %v491 = vpop.f32.mrf.mxu0
    %v492 = vpop.f32.mrf.mxu0
    %v493 = vadd.f32 0.0, %v492
    %v494 = vpop.f32.mrf.mxu0
    %495 = vdwg.mxu0
    %v496 = vadd.f32 %v344, %v482
    %v497 = vadd.f32 %v345, %v485
    %v498 = vadd.f32 %v346, %v490
    %v499 = vadd.f32 %v347, %v493
    %v500 = vld [vmem:[%s0] sm:$0xe]
    %v501 = vld [vmem:[%s0 + $0xc] sm:$0xe]
    %vm508 = vcmask 1042432
    %vm509 = vcmask 1046532
    %vm510 = vmor %vm508, %vm509
    %v511 = vrot.slane %v500, 5
    %v512 = vrot.slane %v511, 4
    %v513 = vrot.slane %v349, 5
    %v514 = vsel %vm510, %v512, %v513
    %v515 = vrot.slane %v513, 4
    %v516 = vrot.slane %v350, 5
    %v517 = vsel %vm510, %v515, %v516
    %v518 = vrot.slane %v501, 5
    %v519 = vrot.slane %v518, 4
    %v520 = vrot.slane %v352, 5
    %v521 = vsel %vm510, %v519, %v520
    %v522 = vrot.slane %v520, 4
    %v523 = vrot.slane %v353, 5
    %v524 = vsel %vm510, %v522, %v523
    %s525 = scalar_lea.vmem [#allocation3], 64
    %v526 = vld [vmem:[%s525] sm:$0xf]
    %v527 = vld [vmem:[%s525 + $0x4] sm:$0xf]
    %v528 = vld [vmem:[%s525 + $0x8] sm:$0xf]
    %v529 = vld [vmem:[%s525 + $0xc] sm:$0xf]
    %v530 = vld [vmem:[%s525 + $0x10] sm:$0xf]
    %v531 = vld [vmem:[%s525 + $0x14] sm:$0xf]
    %v532 = vld [vmem:[%s525 + $0x18] sm:$0xf]
    %v533 = vld [vmem:[%s525 + $0x1c] sm:$0xf]
    %v534 = vunpack.c.l.b16 %v514
    %v535 = vunpack.c.l.b16 %v517
    %v536 = vunpack.c.l.b16 %v521
    %v537 = vunpack.c.l.b16 %v524
    %v538 = vpack.c.b16 %v535, %v534
    %v539 = vpack.c.b16 %v537, %v536
    %v548 = vunpack.c.l.b16 %v526
    %v549 = vunpack.c.l.b16 %v527
    %v550 = vunpack.c.l.b16 %v528
    %v551 = vunpack.c.l.b16 %v529
    %v552 = vunpack.c.l.b16 %v530
    %v553 = vunpack.c.l.b16 %v531
    %v554 = vunpack.c.l.b16 %v532
    %v555 = vunpack.c.l.b16 %v533
    %v556 = vpack.c.b16 %v549, %v548
    %v557 = vpack.c.b16 %v551, %v550
    %v558 = vpack.c.b16 %v553, %v552
    %v559 = vpack.c.b16 %v555, %v554
    %v565 = vsel %vm175, %v538, 0
    %v568 = vsel %vm175, %v539, 0
    %570 = vmatprep.subr.bf16.mxu0 0
    %571 = vmatpush1.bf16.msra.mxu0 0
    %572 = vmatprep.subr.bf16.mxu0 0
    %573 = vmatpush1.bf16.msra.mxu0 0
    %574 = vmatprep.subr.bf16.mxu0 0
    %575 = vmatpush1.bf16.msra.mxu0 0
    %576 = vmatprep.subr.bf16.mxu0 0
    %577 = vmatpush1.bf16.msra.mxu0 0
    %578 = vmatprep.subr.bf16.mxu0 0
    %579 = vmatpush1.bf16.msra.mxu0 %v559
    %580 = vmatprep.subr.bf16.mxu0 0
    %581 = vmatpush1.bf16.msra.mxu0 %v558
    %582 = vmatprep.subr.bf16.mxu0 0
    %583 = vmatpush1.bf16.msra.mxu0 %v557
    %584 = vmatprep.subr.bf16.mxu0 0
    %585 = vmatpush1.bf16.msra.mxu0 %v556
    %586 = vmatprep.subr.bf16.mxu0 0
    %587 = vmatpush2.bf16.msra.mxu0 0
    %588 = vmatprep.subr.bf16.mxu0 0
    %589 = vmatpush2.bf16.msra.mxu0 0
    %590 = vmatprep.subr.bf16.mxu0 0
    %591 = vmatpush2.bf16.msra.mxu0 0
    %592 = vmatprep.subr.bf16.mxu0 0
    %593 = vmatpush2.bf16.msra.mxu0 0
    %594 = vmatprep.subr.bf16.mxu0 0
    %595 = vmatpush2.bf16.msra.mxu0 0
    %596 = vmatprep.subr.bf16.mxu0 0
    %597 = vmatpush2.bf16.msra.mxu0 0
    %598 = vmatprep.subr.bf16.mxu0 0
    %599 = vmatpush2.bf16.msra.mxu0 0
    %600 = vmatprep.subr.bf16.mxu0 0
    %601 = vmatpush2.bf16.msra.mxu0 0
    %602 = vmatprep.mubr.bf16.mxu0 0
    %603 = vmatmul.mubr.bf16.gmra.mxu0 %v565
    %v604 = vpop.f32.mrf.mxu0
    %v605 = vadd.f32 0.0, %v604
    %v606 = vpop.f32.mrf.mxu0
    %v607 = vpop.f32.mrf.mxu0
    %v608 = vadd.f32 0.0, %v607
    %v609 = vpop.f32.mrf.mxu0
    %610 = vmatprep.mubr.bf16.mxu0 0
    %611 = vmatmul.mubr.bf16.gmra.mxu0 %v568
    %v612 = vpop.f32.mrf.mxu0
    %v613 = vadd.f32 0.0, %v612
    %v614 = vpop.f32.mrf.mxu0
    %v615 = vpop.f32.mrf.mxu0
    %v616 = vadd.f32 0.0, %v615
    %v617 = vpop.f32.mrf.mxu0
    %618 = vdwg.mxu0
    %v619 = vadd.f32 %v496, %v605
    %v620 = vadd.f32 %v497, %v608
    %v621 = vadd.f32 %v498, %v613
    %v622 = vadd.f32 %v499, %v616
    %v623 = vadd.f32 %v619, %v620
    %v624 = vadd.f32 %v623, %v621
    %v625 = vadd.f32 %v624, %v622
    %v626 = vrot.slane %v625, 4
    %v627 = vadd.f32 %v625, %v626
    %v628 = vrot.slane %v627, 2
    %v629 = vadd.f32 %v627, %v628
    %v630 = vrot.slane %v629, 1
    %v631 = vadd.f32 %v629, %v630
    %v632 = vmul.f32 %v619, %v619
    %v633 = vmul.f32 %v620, %v620
    %v634 = vmul.f32 %v621, %v621
    %v635 = vmul.f32 %v622, %v622
    %v636 = vadd.f32 %v632, %v633
    %v637 = vadd.f32 %v636, %v634
    %v638 = vadd.f32 %v637, %v635
    %v639 = vrot.slane %v638, 4
    %v640 = vadd.f32 %v638, %v639
    %v641 = vrot.slane %v640, 2
    %v642 = vadd.f32 %v640, %v641
    %v643 = vrot.slane %v642, 1
    %v644 = vadd.f32 %v642, %v643
    %vm645 = vcmask 1040384
    %v646 = vsel %vm645, %v631, %v644
    %v647 = vld [vmem:[#allocation8] sm:$0xff]
    %v648 = vld [vmem:[#allocation8 + $0x8] sm:$0xff]
    %v649 = vld [vmem:[#allocation8 + $0x10] sm:$0xff]
    %v650 = vld [vmem:[#allocation8 + $0x18] sm:$0xff]
    %v651 = vld [vmem:[#allocation8 + $0x20] sm:$0xff]
    %v652 = vld [vmem:[#allocation8 + $0x28] sm:$0xff]
    %v653 = vld [vmem:[#allocation8 + $0x30] sm:$0xff]
    %v654 = vld [vmem:[#allocation8 + $0x38] sm:$0xff]
    %v655 = vld [vmem:[#allocation8 + $0x40] sm:$0xff]
    %v656 = vld [vmem:[#allocation8 + $0x48] sm:$0xff]
    %v657 = vld [vmem:[#allocation8 + $0x50] sm:$0xff]
    %v658 = vld [vmem:[#allocation8 + $0x58] sm:$0xff]
    %v659 = vld [vmem:[#allocation8 + $0x60] sm:$0xff]
    %v660 = vld [vmem:[#allocation8 + $0x68] sm:$0xff]
    %v661 = vld [vmem:[#allocation8 + $0x70] sm:$0xff]
    %v662 = vld [vmem:[#allocation8 + $0x78] sm:$0xff]
    %663 = vmatprep.subr.mxu0 0.0
    %664 = vmatpush1.msra.mxu0 %v662
    %665 = vmatprep.subr.mxu0 0.0
    %666 = vmatpush1.msra.mxu0 %v661
    %667 = vmatprep.subr.mxu0 0.0
    %668 = vmatpush1.msra.mxu0 %v660
    %669 = vmatprep.subr.mxu0 0.0
    %670 = vmatpush1.msra.mxu0 %v659
    %671 = vmatprep.subr.mxu0 0.0
    %672 = vmatpush1.msra.mxu0 %v658
    %673 = vmatprep.subr.mxu0 0.0
    %674 = vmatpush1.msra.mxu0 %v657
    %675 = vmatprep.subr.mxu0 0.0
    %676 = vmatpush1.msra.mxu0 %v656
    %677 = vmatprep.subr.mxu0 0.0
    %678 = vmatpush1.msra.mxu0 %v655
    %679 = vmatprep.subr.mxu0 0.0
    %680 = vmatpush1.msra.mxu0 %v654
    %681 = vmatprep.subr.mxu0 0.0
    %682 = vmatpush1.msra.mxu0 %v653
    %683 = vmatprep.subr.mxu0 0.0
    %684 = vmatpush1.msra.mxu0 %v652
    %685 = vmatprep.subr.mxu0 0.0
    %686 = vmatpush1.msra.mxu0 %v651
    %687 = vmatprep.subr.mxu0 0.0
    %688 = vmatpush1.msra.mxu0 %v650
    %689 = vmatprep.subr.mxu0 0.0
    %690 = vmatpush1.msra.mxu0 %v649
    %691 = vmatprep.subr.mxu0 0.0
    %692 = vmatpush1.msra.mxu0 %v648
    %693 = vmatprep.subr.mxu0 0.0
    %694 = vmatpush1.msra.mxu0 %v647
    %695 = vmatprep.subr.mxu0 0.0
    %696 = vmatpush2.msra.mxu0 0.0
    %697 = vmatprep.subr.mxu0 0.0
    %698 = vmatpush2.msra.mxu0 0.0
    %699 = vmatprep.subr.mxu0 0.0
    %700 = vmatpush2.msra.mxu0 0.0
    %701 = vmatprep.subr.mxu0 0.0
    %702 = vmatpush2.msra.mxu0 0.0
    %703 = vmatprep.subr.mxu0 0.0
    %704 = vmatpush2.msra.mxu0 0.0
    %705 = vmatprep.subr.mxu0 0.0
    %706 = vmatpush2.msra.mxu0 0.0
    %707 = vmatprep.subr.mxu0 0.0
    %708 = vmatpush2.msra.mxu0 0.0
    %709 = vmatprep.subr.mxu0 0.0
    %710 = vmatpush2.msra.mxu0 0.0
    %711 = vmatprep.subr.mxu0 0.0
    %712 = vmatpush2.msra.mxu0 0.0
    %713 = vmatprep.subr.mxu0 0.0
    %714 = vmatpush2.msra.mxu0 0.0
    %715 = vmatprep.subr.mxu0 0.0
    %716 = vmatpush2.msra.mxu0 0.0
    %717 = vmatprep.subr.mxu0 0.0
    %718 = vmatpush2.msra.mxu0 0.0
    %719 = vmatprep.subr.mxu0 0.0
    %720 = vmatpush2.msra.mxu0 0.0
    %721 = vmatprep.subr.mxu0 0.0
    %722 = vmatpush2.msra.mxu0 0.0
    %723 = vmatprep.subr.mxu0 0.0
    %724 = vmatpush2.msra.mxu0 0.0
    %725 = vmatprep.subr.mxu0 0.0
    %726 = vmatpush2.msra.mxu0 0.0
    %727 = vmatprep.mubr.f32.mxu0 0.0
    %728 = vmatmul.mubr.f32.gmra.mxu0 %v646
    %v729 = vpop.f32.mrf.mxu0
    %v730 = vadd.f32 0.0, %v729
    %v731 = vpop.f32.mrf.mxu0
    %732 = vdwg.mxu0
    %v733 = vmul.f32 %v730, 0.001953125
    %v734 = vmul.f32 %v733, %v733
    %v736 = vrot.slane %v734, 7
    %v738 = vsub.f32 %v733, %v736
    %v739 = vlaneseq
    %v740 = vshrl.u32 %v739, 7
    %v741 = vsub.s32 0, %v740
    %v742 = vrot.slane %v733, %v741
    %v743 = vsub.f32 %v619, %v742
    %v744 = vsub.f32 %v620, %v742
    %v745 = vsub.f32 %v621, %v742
    %v746 = vsub.f32 %v622, %v742
    %v747 = vadd.f32 %v738, 1e-05
    %v748 = vrsqrt.pop %v747
    %v749 = vlaneseq
    %v750 = vshrl.u32 %v749, 7
    %v751 = vsub.s32 1, %v750
    %v752 = vrot.slane %v748, %v751
    %v753 = vmul.f32 %v743, %v752
    %v754 = vmul.f32 %v744, %v752
    %v755 = vmul.f32 %v745, %v752
    %v756 = vmul.f32 %v746, %v752
    %v757 = vlaneseq
    %v758 = vshrl.u32 %v757, 7
    %v759 = vsub.s32 0, %v758
    %v760 = vrot.slane %v70, %v759
    %v761 = vmul.f32 %v753, %v760
    %v762 = vmul.f32 %v754, %v760
    %v763 = vmul.f32 %v755, %v760
    %v764 = vmul.f32 %v756, %v760
    %v765 = vlaneseq
    %v766 = vshrl.u32 %v765, 7
    %v767 = vsub.s32 0, %v766
    %v768 = vrot.slane %v71, %v767
    %v769 = vadd.f32 %v761, %v768
    %v770 = vadd.f32 %v762, %v768
    %v771 = vadd.f32 %v763, %v768
    %v772 = vadd.f32 %v764, %v768
    %v773 = vmax.f32 %v769, 0.0
    %v774 = vmax.f32 %v770, 0.0
    %v775 = vmax.f32 %v771, 0.0
    %v776 = vmax.f32 %v772, 0.0
    %vm777 = vcmask 1040384
    %vm778 = vsmask.f32 256
    %vm779 = vmand %vm777, %vm778
    %v780 = vld [vmem:[#allocation2] sm:$0x1]
    %v781 = vsel %vm779, 0, %v780
    %782 = vst [vmem:[#allocation2] sm:$0x1] %v781
    %v783 = vld [vmem:[#allocation2 + $0xc] sm:$0x1]
    %v784 = vsel %vm779, 0, %v783
    %785 = vst [vmem:[#allocation2 + $0xc] sm:$0x1] %v784
    %vm786 = vsmask.f32 7938
    %vm787 = vmand %vm777, %vm786
    %v788 = vld [vmem:[#allocation2 + $0x8] sm:$0x1]
    %v789 = vsel %vm787, 0, %v788
    %790 = vst [vmem:[#allocation2 + $0x8] sm:$0x1] %v789
    %v791 = vld [vmem:[#allocation2 + $0x14] sm:$0x1]
    %v792 = vsel %vm787, 0, %v791
    %793 = vst [vmem:[#allocation2 + $0x14] sm:$0x1] %v792
    %v794 = vpack.c.bf16 %v774, %v773
    %v795 = vpack.c.bf16 %v776, %v775
    %v798 = vunpack.c.l.b16 %v794
    %v799 = vunpack.c.h.b16 %v794
    %v800 = vunpack.c.l.b16 %v795
    %v801 = vunpack.c.h.b16 %v795
    %v802 = vpack.c.b16 %v798, %v798
    %v803 = vpack.c.b16 %v799, %v799
    %v804 = vpack.c.b16 %v800, %v800
    %v805 = vpack.c.b16 %v801, %v801
    %vm806 = vsmask.f32 4368
    %vm807 = vmor %vm778, %vm806
    %v809 = vshrl.u32 %v802, 16
    %v811 = vrot.slane %v809, 7
    %v812 = vshll.u32 %v802, 16
    %v814 = vor.u32 %v811, %v812
    %v815 = vrot.slane %v811, 4
    %v817 = vshrl.u32 %v803, 16
    %v819 = vrot.slane %v817, 7
    %v820 = vshll.u32 %v803, 16
    %v822 = vor.u32 %v819, %v820
    %v823 = vsel %vm807, %v815, %v822
    %v824 = vrot.slane %v819, 4
    %v826 = vshrl.u32 %v804, 16
    %v828 = vrot.slane %v826, 7
    %v829 = vshll.u32 %v804, 16
    %v831 = vor.u32 %v828, %v829
    %v832 = vrot.slane %v828, 4
    %v834 = vshrl.u32 %v805, 16
    %v836 = vrot.slane %v834, 7
    %v837 = vshll.u32 %v805, 16
    %v839 = vor.u32 %v836, %v837
    %v840 = vsel %vm807, %v832, %v839
    %v841 = vrot.slane %v836, 4
    %vm848 = vcmask 1043456
    %vm849 = vmand %vm848, %vm786
    %v850 = vld [vmem:[#allocation2] sm:$0xf]
    %v851 = vsel %vm849, %v814, %v850
    %852 = vst [vmem:[#allocation2] sm:$0xf] %v851
    %853 = vst [vmem:[#allocation2 + $0x4] sm:$0xf] %v823
    %v854 = vld [vmem:[#allocation2 + $0x8] sm:$0x1]
    %v855 = vsel %vm779, %v824, %v854
    %856 = vst [vmem:[#allocation2 + $0x8] sm:$0x1] %v855
    %v857 = vld [vmem:[#allocation2 + $0xc] sm:$0xf]
    %v858 = vsel %vm849, %v831, %v857
    %859 = vst [vmem:[#allocation2 + $0xc] sm:$0xf] %v858
    %860 = vst [vmem:[#allocation2 + $0x10] sm:$0xf] %v840
    %v861 = vld [vmem:[#allocation2 + $0x14] sm:$0x1]
    %v862 = vsel %vm779, %v841, %v861
    %863 = vst [vmem:[#allocation2 + $0x14] sm:$0x1] %v862
    %v864 = vld [vmem:[#allocation2] sm:$0xf]
    %v865 = vld [vmem:[#allocation2 + $0x4] sm:$0xf]
    %v866 = vld [vmem:[#allocation2 + $0xc] sm:$0xf]
    %v867 = vld [vmem:[#allocation2 + $0x10] sm:$0xf]
    %v868 = vld [vmem:[#allocation6] sm:$0xf]
    %v869 = vld [vmem:[#allocation6 + $0x4] sm:$0xf]
    %v870 = vld [vmem:[#allocation6 + $0x8] sm:$0xf]
    %v871 = vld [vmem:[#allocation6 + $0xc] sm:$0xf]
    %v872 = vld [vmem:[#allocation6 + $0x10] sm:$0xf]
    %v873 = vld [vmem:[#allocation6 + $0x14] sm:$0xf]
    %v874 = vld [vmem:[#allocation6 + $0x18] sm:$0xf]
    %v875 = vld [vmem:[#allocation6 + $0x1c] sm:$0xf]
    %v876 = vld [vmem:[#allocation6 + $0x20] sm:$0xf]
    %v877 = vld [vmem:[#allocation6 + $0x24] sm:$0xf]
    %v878 = vld [vmem:[#allocation6 + $0x28] sm:$0xf]
    %v879 = vld [vmem:[#allocation6 + $0x2c] sm:$0xf]
    %v880 = vld [vmem:[#allocation6 + $0x30] sm:$0xf]
    %v881 = vld [vmem:[#allocation6 + $0x34] sm:$0xf]
    %v882 = vld [vmem:[#allocation6 + $0x38] sm:$0xf]
    %v883 = vld [vmem:[#allocation6 + $0x3c] sm:$0xf]
    %v888 = vunpack.c.l.b16 %v864
    %v889 = vunpack.c.l.b16 %v865
    %v890 = vunpack.c.l.b16 %v866
    %v891 = vunpack.c.l.b16 %v867
    %v892 = vpack.c.b16 %v889, %v888
    %v893 = vpack.c.b16 %v891, %v890
    %v912 = vunpack.c.l.b16 %v868
    %v913 = vunpack.c.l.b16 %v869
    %v914 = vunpack.c.l.b16 %v870
    %v915 = vunpack.c.l.b16 %v871
    %v916 = vunpack.c.l.b16 %v872
    %v917 = vunpack.c.l.b16 %v873
    %v918 = vunpack.c.l.b16 %v874
    %v919 = vunpack.c.l.b16 %v875
    %v920 = vunpack.c.l.b16 %v876
    %v921 = vunpack.c.l.b16 %v877
    %v922 = vunpack.c.l.b16 %v878
    %v923 = vunpack.c.l.b16 %v879
    %v924 = vunpack.c.l.b16 %v880
    %v925 = vunpack.c.l.b16 %v881
    %v926 = vunpack.c.l.b16 %v882
    %v927 = vunpack.c.l.b16 %v883
    %v928 = vpack.c.b16 %v913, %v912
    %v929 = vpack.c.b16 %v915, %v914
    %v930 = vpack.c.b16 %v917, %v916
    %v931 = vpack.c.b16 %v919, %v918
    %v932 = vpack.c.b16 %v921, %v920
    %v933 = vpack.c.b16 %v923, %v922
    %v934 = vpack.c.b16 %v925, %v924
    %v935 = vpack.c.b16 %v927, %v926
    %944 = vmatprep.subr.bf16.mxu0 0
    %945 = vmatpush1.bf16.msra.mxu0 %v935
    %946 = vmatprep.subr.bf16.mxu0 0
    %947 = vmatpush1.bf16.msra.mxu0 %v934
    %948 = vmatprep.subr.bf16.mxu0 0
    %949 = vmatpush1.bf16.msra.mxu0 %v933
    %950 = vmatprep.subr.bf16.mxu0 0
    %951 = vmatpush1.bf16.msra.mxu0 %v932
    %952 = vmatprep.subr.bf16.mxu0 0
    %953 = vmatpush1.bf16.msra.mxu0 %v931
    %954 = vmatprep.subr.bf16.mxu0 0
    %955 = vmatpush1.bf16.msra.mxu0 %v930
    %956 = vmatprep.subr.bf16.mxu0 0
    %957 = vmatpush1.bf16.msra.mxu0 %v929
    %958 = vmatprep.subr.bf16.mxu0 0
    %959 = vmatpush1.bf16.msra.mxu0 %v928
    %960 = vmatprep.subr.bf16.mxu0 0
    %961 = vmatpush2.bf16.msra.mxu0 0
    %962 = vmatprep.subr.bf16.mxu0 0
    %963 = vmatpush2.bf16.msra.mxu0 0
    %964 = vmatprep.subr.bf16.mxu0 0
    %965 = vmatpush2.bf16.msra.mxu0 0
    %966 = vmatprep.subr.bf16.mxu0 0
    %967 = vmatpush2.bf16.msra.mxu0 0
    %968 = vmatprep.subr.bf16.mxu0 0
    %969 = vmatpush2.bf16.msra.mxu0 0
    %970 = vmatprep.subr.bf16.mxu0 0
    %971 = vmatpush2.bf16.msra.mxu0 0
    %972 = vmatprep.subr.bf16.mxu0 0
    %973 = vmatpush2.bf16.msra.mxu0 0
    %974 = vmatprep.subr.bf16.mxu0 0
    %975 = vmatpush2.bf16.msra.mxu0 0
    %976 = vmatprep.mubr.bf16.mxu0 0
    %977 = vmatmul.mubr.bf16.gmra.mxu0 %v892
    %v978 = vpop.f32.mrf.mxu0
    %v979 = vadd.f32 0.0, %v978
    %v980 = vpop.f32.mrf.mxu0
    %v981 = vpop.f32.mrf.mxu0
    %v982 = vadd.f32 0.0, %v981
    %v983 = vpop.f32.mrf.mxu0
    %984 = vmatprep.mubr.bf16.mxu0 0
    %985 = vmatmul.mubr.bf16.gmra.mxu0 %v893
    %v986 = vpop.f32.mrf.mxu0
    %v987 = vadd.f32 0.0, %v986
    %v988 = vpop.f32.mrf.mxu0
    %v989 = vpop.f32.mrf.mxu0
    %v990 = vadd.f32 0.0, %v989
    %v991 = vpop.f32.mrf.mxu0
    %992 = vdwg.mxu0
    %v993 = vlaneseq
    %v994 = vshrl.u32 %v993, 7
    %v995 = vsub.s32 0, %v994
    %v996 = vrot.slane %v72, %v995
    %v997 = vadd.f32 %v996, %v979
    %v998 = vadd.f32 %v996, %v982
    %v999 = vadd.f32 %v996, %v987
    %v1000 = vadd.f32 %v996, %v990
    %v1001 = vld [vmem:[#allocation2] sm:$0xf]
    %v1002 = vld [vmem:[#allocation2 + $0x4] sm:$0xf]
    %v1003 = vld [vmem:[#allocation2 + $0x8] sm:$0x1]
    %v1004 = vld [vmem:[#allocation2 + $0xc] sm:$0xf]
    %v1005 = vld [vmem:[#allocation2 + $0x10] sm:$0xf]
    %v1006 = vld [vmem:[#allocation2 + $0x14] sm:$0x1]
    %v1008 = vshrl.u32 %v1001, 16
    %v1010 = vrot.slane %v1008, 4
    %v1011 = vshll.u32 %v1001, 16
    %v1013 = vrot.slane %v1011, 5
    %v1014 = vor.u32 %v1010, %v1013
    %v1015 = vrot.slane %v1014, 4
    %v1017 = vshll.u32 %v1002, 16
    %v1019 = vrot.slane %v1017, 5
    %v1020 = vsel %vm83, %v1015, %v1019
    %v1021 = vshrl.u32 %v1002, 16
    %v1023 = vrot.slane %v1021, 4
    %v1024 = vor.u32 %v1023, %v1019
    %v1025 = vrot.slane %v1024, 4
    %v1027 = vshll.u32 %v1003, 16
    %v1029 = vrot.slane %v1027, 5
    %v1030 = vsel %vm83, %v1025, %v1029
    %v1032 = vshrl.u32 %v1004, 16
    %v1034 = vrot.slane %v1032, 4
    %v1035 = vshll.u32 %v1004, 16
    %v1037 = vrot.slane %v1035, 5
    %v1038 = vor.u32 %v1034, %v1037
    %v1039 = vrot.slane %v1038, 4
    %v1041 = vshll.u32 %v1005, 16
    %v1043 = vrot.slane %v1041, 5
    %v1044 = vsel %vm83, %v1039, %v1043
    %v1045 = vshrl.u32 %v1005, 16
    %v1047 = vrot.slane %v1045, 4
    %v1048 = vor.u32 %v1047, %v1043
    %v1049 = vrot.slane %v1048, 4
    %v1051 = vshll.u32 %v1006, 16
    %v1053 = vrot.slane %v1051, 5
    %v1054 = vsel %vm83, %v1049, %v1053
    %s1055 = scalar_lea.vmem [#allocation6], 64
    %v1056 = vld [vmem:[%s1055] sm:$0xf]
    %v1057 = vld [vmem:[%s1055 + $0x4] sm:$0xf]
    %v1058 = vld [vmem:[%s1055 + $0x8] sm:$0xf]
    %v1059 = vld [vmem:[%s1055 + $0xc] sm:$0xf]
    %v1060 = vld [vmem:[%s1055 + $0x10] sm:$0xf]
    %v1061 = vld [vmem:[%s1055 + $0x14] sm:$0xf]
    %v1062 = vld [vmem:[%s1055 + $0x18] sm:$0xf]
    %v1063 = vld [vmem:[%s1055 + $0x1c] sm:$0xf]
    %v1064 = vld [vmem:[%s1055 + $0x20] sm:$0xf]
    %v1065 = vld [vmem:[%s1055 + $0x24] sm:$0xf]
    %v1066 = vld [vmem:[%s1055 + $0x28] sm:$0xf]
    %v1067 = vld [vmem:[%s1055 + $0x2c] sm:$0xf]
    %v1068 = vld [vmem:[%s1055 + $0x30] sm:$0xf]
    %v1069 = vld [vmem:[%s1055 + $0x34] sm:$0xf]
    %v1070 = vld [vmem:[%s1055 + $0x38] sm:$0xf]
    %v1071 = vld [vmem:[%s1055 + $0x3c] sm:$0xf]
    %v1072 = vunpack.c.l.b16 %v1020
    %v1073 = vunpack.c.l.b16 %v1030
    %v1074 = vunpack.c.l.b16 %v1044
    %v1075 = vunpack.c.l.b16 %v1054
    %v1076 = vpack.c.b16 %v1073, %v1072
    %v1077 = vpack.c.b16 %v1075, %v1074
    %v1096 = vunpack.c.l.b16 %v1056
    %v1097 = vunpack.c.l.b16 %v1057
    %v1098 = vunpack.c.l.b16 %v1058
    %v1099 = vunpack.c.l.b16 %v1059
    %v1100 = vunpack.c.l.b16 %v1060
    %v1101 = vunpack.c.l.b16 %v1061
    %v1102 = vunpack.c.l.b16 %v1062
    %v1103 = vunpack.c.l.b16 %v1063
    %v1104 = vunpack.c.l.b16 %v1064
    %v1105 = vunpack.c.l.b16 %v1065
    %v1106 = vunpack.c.l.b16 %v1066
    %v1107 = vunpack.c.l.b16 %v1067
    %v1108 = vunpack.c.l.b16 %v1068
    %v1109 = vunpack.c.l.b16 %v1069
    %v1110 = vunpack.c.l.b16 %v1070
    %v1111 = vunpack.c.l.b16 %v1071
    %v1112 = vpack.c.b16 %v1097, %v1096
    %v1113 = vpack.c.b16 %v1099, %v1098
    %v1114 = vpack.c.b16 %v1101, %v1100
    %v1115 = vpack.c.b16 %v1103, %v1102
    %v1116 = vpack.c.b16 %v1105, %v1104
    %v1117 = vpack.c.b16 %v1107, %v1106
    %v1118 = vpack.c.b16 %v1109, %v1108
    %v1119 = vpack.c.b16 %v1111, %v1110
    %1128 = vmatprep.subr.bf16.mxu0 0
    %1129 = vmatpush1.bf16.msra.mxu0 %v1119
    %1130 = vmatprep.subr.bf16.mxu0 0
    %1131 = vmatpush1.bf16.msra.mxu0 %v1118
    %1132 = vmatprep.subr.bf16.mxu0 0
    %1133 = vmatpush1.bf16.msra.mxu0 %v1117
    %1134 = vmatprep.subr.bf16.mxu0 0
    %1135 = vmatpush1.bf16.msra.mxu0 %v1116
    %1136 = vmatprep.subr.bf16.mxu0 0
    %1137 = vmatpush1.bf16.msra.mxu0 %v1115
    %1138 = vmatprep.subr.bf16.mxu0 0
    %1139 = vmatpush1.bf16.msra.mxu0 %v1114
    %1140 = vmatprep.subr.bf16.mxu0 0
    %1141 = vmatpush1.bf16.msra.mxu0 %v1113
    %1142 = vmatprep.subr.bf16.mxu0 0
    %1143 = vmatpush1.bf16.msra.mxu0 %v1112
    %1144 = vmatprep.subr.bf16.mxu0 0
    %1145 = vmatpush2.bf16.msra.mxu0 0
    %1146 = vmatprep.subr.bf16.mxu0 0
    %1147 = vmatpush2.bf16.msra.mxu0 0
    %1148 = vmatprep.subr.bf16.mxu0 0
    %1149 = vmatpush2.bf16.msra.mxu0 0
    %1150 = vmatprep.subr.bf16.mxu0 0
    %1151 = vmatpush2.bf16.msra.mxu0 0
    %1152 = vmatprep.subr.bf16.mxu0 0
    %1153 = vmatpush2.bf16.msra.mxu0 0
    %1154 = vmatprep.subr.bf16.mxu0 0
    %1155 = vmatpush2.bf16.msra.mxu0 0
    %1156 = vmatprep.subr.bf16.mxu0 0
    %1157 = vmatpush2.bf16.msra.mxu0 0
    %1158 = vmatprep.subr.bf16.mxu0 0
    %1159 = vmatpush2.bf16.msra.mxu0 0
    %1160 = vmatprep.mubr.bf16.mxu0 0
    %1161 = vmatmul.mubr.bf16.gmra.mxu0 %v1076
    %v1162 = vpop.f32.mrf.mxu0
    %v1163 = vadd.f32 0.0, %v1162
    %v1164 = vpop.f32.mrf.mxu0
    %v1165 = vpop.f32.mrf.mxu0
    %v1166 = vadd.f32 0.0, %v1165
    %v1167 = vpop.f32.mrf.mxu0
    %1168 = vmatprep.mubr.bf16.mxu0 0
    %1169 = vmatmul.mubr.bf16.gmra.mxu0 %v1077
    %v1170 = vpop.f32.mrf.mxu0
    %v1171 = vadd.f32 0.0, %v1170
    %v1172 = vpop.f32.mrf.mxu0
    %v1173 = vpop.f32.mrf.mxu0
    %v1174 = vadd.f32 0.0, %v1173
    %v1175 = vpop.f32.mrf.mxu0
    %1176 = vdwg.mxu0
    %v1177 = vadd.f32 %v997, %v1163
    %v1178 = vadd.f32 %v998, %v1166
    %v1179 = vadd.f32 %v999, %v1171
    %v1180 = vadd.f32 %v1000, %v1174
    %v1181 = vld [vmem:[#allocation2] sm:$0xe]
    %v1182 = vld [vmem:[#allocation2 + $0xc] sm:$0xe]
    %v1189 = vrot.slane %v1181, 5
    %v1190 = vrot.slane %v1189, 4
    %v1191 = vrot.slane %v1002, 5
    %v1192 = vsel %vm510, %v1190, %v1191
    %v1193 = vrot.slane %v1191, 4
    %v1194 = vrot.slane %v1003, 5
    %v1195 = vsel %vm510, %v1193, %v1194
    %v1196 = vrot.slane %v1182, 5
    %v1197 = vrot.slane %v1196, 4
    %v1198 = vrot.slane %v1005, 5
    %v1199 = vsel %vm510, %v1197, %v1198
    %v1200 = vrot.slane %v1198, 4
    %v1201 = vrot.slane %v1006, 5
    %v1202 = vsel %vm510, %v1200, %v1201
    %s1203 = scalar_lea.vmem [#allocation6], 128
    %v1204 = vld [vmem:[%s1203] sm:$0xf]
    %v1205 = vld [vmem:[%s1203 + $0x4] sm:$0xf]
    %v1206 = vld [vmem:[%s1203 + $0x8] sm:$0xf]
    %v1207 = vld [vmem:[%s1203 + $0xc] sm:$0xf]
    %v1208 = vld [vmem:[%s1203 + $0x10] sm:$0xf]
    %v1209 = vld [vmem:[%s1203 + $0x14] sm:$0xf]
    %v1210 = vld [vmem:[%s1203 + $0x18] sm:$0xf]
    %v1211 = vld [vmem:[%s1203 + $0x1c] sm:$0xf]
    %v1212 = vld [vmem:[%s1203 + $0x20] sm:$0xf]
    %v1213 = vld [vmem:[%s1203 + $0x24] sm:$0xf]
    %v1214 = vld [vmem:[%s1203 + $0x28] sm:$0xf]
    %v1215 = vld [vmem:[%s1203 + $0x2c] sm:$0xf]
    %v1216 = vld [vmem:[%s1203 + $0x30] sm:$0xf]
    %v1217 = vld [vmem:[%s1203 + $0x34] sm:$0xf]
    %v1218 = vld [vmem:[%s1203 + $0x38] sm:$0xf]
    %v1219 = vld [vmem:[%s1203 + $0x3c] sm:$0xf]
    %v1220 = vunpack.c.l.b16 %v1192
    %v1221 = vunpack.c.l.b16 %v1195
    %v1222 = vunpack.c.l.b16 %v1199
    %v1223 = vunpack.c.l.b16 %v1202
    %v1224 = vpack.c.b16 %v1221, %v1220
    %v1225 = vpack.c.b16 %v1223, %v1222
    %v1244 = vunpack.c.l.b16 %v1204
    %v1245 = vunpack.c.l.b16 %v1205
    %v1246 = vunpack.c.l.b16 %v1206
    %v1247 = vunpack.c.l.b16 %v1207
    %v1248 = vunpack.c.l.b16 %v1208
    %v1249 = vunpack.c.l.b16 %v1209
    %v1250 = vunpack.c.l.b16 %v1210
    %v1251 = vunpack.c.l.b16 %v1211
    %v1252 = vunpack.c.l.b16 %v1212
    %v1253 = vunpack.c.l.b16 %v1213
    %v1254 = vunpack.c.l.b16 %v1214
    %v1255 = vunpack.c.l.b16 %v1215
    %v1256 = vunpack.c.l.b16 %v1216
    %v1257 = vunpack.c.l.b16 %v1217
    %v1258 = vunpack.c.l.b16 %v1218
    %v1259 = vunpack.c.l.b16 %v1219
    %v1260 = vpack.c.b16 %v1245, %v1244
    %v1261 = vpack.c.b16 %v1247, %v1246
    %v1262 = vpack.c.b16 %v1249, %v1248
    %v1263 = vpack.c.b16 %v1251, %v1250
    %v1264 = vpack.c.b16 %v1253, %v1252
    %v1265 = vpack.c.b16 %v1255, %v1254
    %v1266 = vpack.c.b16 %v1257, %v1256
    %v1267 = vpack.c.b16 %v1259, %v1258
    %1276 = vmatprep.subr.bf16.mxu0 0
    %1277 = vmatpush1.bf16.msra.mxu0 %v1267
    %1278 = vmatprep.subr.bf16.mxu0 0
    %1279 = vmatpush1.bf16.msra.mxu0 %v1266
    %1280 = vmatprep.subr.bf16.mxu0 0
    %1281 = vmatpush1.bf16.msra.mxu0 %v1265
    %1282 = vmatprep.subr.bf16.mxu0 0
    %1283 = vmatpush1.bf16.msra.mxu0 %v1264
    %1284 = vmatprep.subr.bf16.mxu0 0
    %1285 = vmatpush1.bf16.msra.mxu0 %v1263
    %1286 = vmatprep.subr.bf16.mxu0 0
    %1287 = vmatpush1.bf16.msra.mxu0 %v1262
    %1288 = vmatprep.subr.bf16.mxu0 0
    %1289 = vmatpush1.bf16.msra.mxu0 %v1261
    %1290 = vmatprep.subr.bf16.mxu0 0
    %1291 = vmatpush1.bf16.msra.mxu0 %v1260
    %1292 = vmatprep.subr.bf16.mxu0 0
    %1293 = vmatpush2.bf16.msra.mxu0 0
    %1294 = vmatprep.subr.bf16.mxu0 0
    %1295 = vmatpush2.bf16.msra.mxu0 0
    %1296 = vmatprep.subr.bf16.mxu0 0
    %1297 = vmatpush2.bf16.msra.mxu0 0
    %1298 = vmatprep.subr.bf16.mxu0 0
    %1299 = vmatpush2.bf16.msra.mxu0 0
    %1300 = vmatprep.subr.bf16.mxu0 0
    %1301 = vmatpush2.bf16.msra.mxu0 0
    %1302 = vmatprep.subr.bf16.mxu0 0
    %1303 = vmatpush2.bf16.msra.mxu0 0
    %1304 = vmatprep.subr.bf16.mxu0 0
    %1305 = vmatpush2.bf16.msra.mxu0 0
    %1306 = vmatprep.subr.bf16.mxu0 0
    %1307 = vmatpush2.bf16.msra.mxu0 0
    %1308 = vmatprep.mubr.bf16.mxu0 0
    %1309 = vmatmul.mubr.bf16.gmra.mxu0 %v1224
    %v1310 = vpop.f32.mrf.mxu0
    %v1311 = vadd.f32 0.0, %v1310
    %v1312 = vpop.f32.mrf.mxu0
    %v1313 = vpop.f32.mrf.mxu0
    %v1314 = vadd.f32 0.0, %v1313
    %v1315 = vpop.f32.mrf.mxu0
    %1316 = vmatprep.mubr.bf16.mxu0 0
    %1317 = vmatmul.mubr.bf16.gmra.mxu0 %v1225
    %v1318 = vpop.f32.mrf.mxu0
    %v1319 = vadd.f32 0.0, %v1318
    %v1320 = vpop.f32.mrf.mxu0
    %v1321 = vpop.f32.mrf.mxu0
    %v1322 = vadd.f32 0.0, %v1321
    %v1323 = vpop.f32.mrf.mxu0
    %1324 = vdwg.mxu0
    %v1325 = vadd.f32 %v1177, %v1311
    %v1326 = vadd.f32 %v1178, %v1314
    %v1327 = vadd.f32 %v1179, %v1319
    %v1328 = vadd.f32 %v1180, %v1322
    %v1329 = vadd.f32 %v1325, %v1326
    %v1330 = vadd.f32 %v1329, %v1327
    %v1331 = vadd.f32 %v1330, %v1328
    %v1332 = vrot.slane %v1331, 4
    %v1333 = vadd.f32 %v1331, %v1332
    %v1334 = vrot.slane %v1333, 2
    %v1335 = vadd.f32 %v1333, %v1334
    %v1336 = vrot.slane %v1335, 1
    %v1337 = vadd.f32 %v1335, %v1336
    %v1338 = vmul.f32 %v1325, %v1325
    %v1339 = vmul.f32 %v1326, %v1326
    %v1340 = vmul.f32 %v1327, %v1327
    %v1341 = vmul.f32 %v1328, %v1328
    %v1342 = vadd.f32 %v1338, %v1339
    %v1343 = vadd.f32 %v1342, %v1340
    %v1344 = vadd.f32 %v1343, %v1341
    %v1345 = vrot.slane %v1344, 4
    %v1346 = vadd.f32 %v1344, %v1345
    %v1347 = vrot.slane %v1346, 2
    %v1348 = vadd.f32 %v1346, %v1347
    %v1349 = vrot.slane %v1348, 1
    %v1350 = vadd.f32 %v1348, %v1349
    %v1351 = vsel %vm645, %v1337, %v1350
    %v1352 = vld [vmem:[#allocation8] sm:$0xff]
    %v1353 = vld [vmem:[#allocation8 + $0x8] sm:$0xff]
    %v1354 = vld [vmem:[#allocation8 + $0x10] sm:$0xff]
    %v1355 = vld [vmem:[#allocation8 + $0x18] sm:$0xff]
    %v1356 = vld [vmem:[#allocation8 + $0x20] sm:$0xff]
    %v1357 = vld [vmem:[#allocation8 + $0x28] sm:$0xff]
    %v1358 = vld [vmem:[#allocation8 + $0x30] sm:$0xff]
    %v1359 = vld [vmem:[#allocation8 + $0x38] sm:$0xff]
    %v1360 = vld [vmem:[#allocation8 + $0x40] sm:$0xff]
    %v1361 = vld [vmem:[#allocation8 + $0x48] sm:$0xff]
    %v1362 = vld [vmem:[#allocation8 + $0x50] sm:$0xff]
    %v1363 = vld [vmem:[#allocation8 + $0x58] sm:$0xff]
    %v1364 = vld [vmem:[#allocation8 + $0x60] sm:$0xff]
    %v1365 = vld [vmem:[#allocation8 + $0x68] sm:$0xff]
    %v1366 = vld [vmem:[#allocation8 + $0x70] sm:$0xff]
    %v1367 = vld [vmem:[#allocation8 + $0x78] sm:$0xff]
    %1368 = vmatprep.subr.mxu0 0.0
    %1369 = vmatpush1.msra.mxu0 %v1367
    %1370 = vmatprep.subr.mxu0 0.0
    %1371 = vmatpush1.msra.mxu0 %v1366
    %1372 = vmatprep.subr.mxu0 0.0
    %1373 = vmatpush1.msra.mxu0 %v1365
    %1374 = vmatprep.subr.mxu0 0.0
    %1375 = vmatpush1.msra.mxu0 %v1364
    %1376 = vmatprep.subr.mxu0 0.0
    %1377 = vmatpush1.msra.mxu0 %v1363
    %1378 = vmatprep.subr.mxu0 0.0
    %1379 = vmatpush1.msra.mxu0 %v1362
    %1380 = vmatprep.subr.mxu0 0.0
    %1381 = vmatpush1.msra.mxu0 %v1361
    %1382 = vmatprep.subr.mxu0 0.0
    %1383 = vmatpush1.msra.mxu0 %v1360
    %1384 = vmatprep.subr.mxu0 0.0
    %1385 = vmatpush1.msra.mxu0 %v1359
    %1386 = vmatprep.subr.mxu0 0.0
    %1387 = vmatpush1.msra.mxu0 %v1358
    %1388 = vmatprep.subr.mxu0 0.0
    %1389 = vmatpush1.msra.mxu0 %v1357
    %1390 = vmatprep.subr.mxu0 0.0
    %1391 = vmatpush1.msra.mxu0 %v1356
    %1392 = vmatprep.subr.mxu0 0.0
    %1393 = vmatpush1.msra.mxu0 %v1355
    %1394 = vmatprep.subr.mxu0 0.0
    %1395 = vmatpush1.msra.mxu0 %v1354
    %1396 = vmatprep.subr.mxu0 0.0
    %1397 = vmatpush1.msra.mxu0 %v1353
    %1398 = vmatprep.subr.mxu0 0.0
    %1399 = vmatpush1.msra.mxu0 %v1352
    %1400 = vmatprep.subr.mxu0 0.0
    %1401 = vmatpush2.msra.mxu0 0.0
    %1402 = vmatprep.subr.mxu0 0.0
    %1403 = vmatpush2.msra.mxu0 0.0
    %1404 = vmatprep.subr.mxu0 0.0
    %1405 = vmatpush2.msra.mxu0 0.0
    %1406 = vmatprep.subr.mxu0 0.0
    %1407 = vmatpush2.msra.mxu0 0.0
    %1408 = vmatprep.subr.mxu0 0.0
    %1409 = vmatpush2.msra.mxu0 0.0
    %1410 = vmatprep.subr.mxu0 0.0
    %1411 = vmatpush2.msra.mxu0 0.0
    %1412 = vmatprep.subr.mxu0 0.0
    %1413 = vmatpush2.msra.mxu0 0.0
    %1414 = vmatprep.subr.mxu0 0.0
    %1415 = vmatpush2.msra.mxu0 0.0
    %1416 = vmatprep.subr.mxu0 0.0
    %1417 = vmatpush2.msra.mxu0 0.0
    %1418 = vmatprep.subr.mxu0 0.0
    %1419 = vmatpush2.msra.mxu0 0.0
    %1420 = vmatprep.subr.mxu0 0.0
    %1421 = vmatpush2.msra.mxu0 0.0
    %1422 = vmatprep.subr.mxu0 0.0
    %1423 = vmatpush2.msra.mxu0 0.0
    %1424 = vmatprep.subr.mxu0 0.0
    %1425 = vmatpush2.msra.mxu0 0.0
    %1426 = vmatprep.subr.mxu0 0.0
    %1427 = vmatpush2.msra.mxu0 0.0
    %1428 = vmatprep.subr.mxu0 0.0
    %1429 = vmatpush2.msra.mxu0 0.0
    %1430 = vmatprep.subr.mxu0 0.0
    %1431 = vmatpush2.msra.mxu0 0.0
    %1432 = vmatprep.mubr.f32.mxu0 0.0
    %1433 = vmatmul.mubr.f32.gmra.mxu0 %v1351
    %v1434 = vpop.f32.mrf.mxu0
    %v1435 = vadd.f32 0.0, %v1434
    %v1436 = vpop.f32.mrf.mxu0
    %1437 = vdwg.mxu0
    %v1438 = vmul.f32 %v1435, 0.001953125
    %v1439 = vmul.f32 %v1438, %v1438
    %v1441 = vrot.slane %v1439, 7
    %v1443 = vsub.f32 %v1438, %v1441
    %v1444 = vlaneseq
    %v1445 = vshrl.u32 %v1444, 7
    %v1446 = vsub.s32 0, %v1445
    %v1447 = vrot.slane %v1438, %v1446
    %v1448 = vsub.f32 %v1325, %v1447
    %v1449 = vsub.f32 %v1326, %v1447
    %v1450 = vsub.f32 %v1327, %v1447
    %v1451 = vsub.f32 %v1328, %v1447
    %v1452 = vadd.f32 %v1443, 1e-05
    %v1453 = vrsqrt.pop %v1452
    %v1454 = vlaneseq
    %v1455 = vshrl.u32 %v1454, 7
    %v1456 = vsub.s32 1, %v1455
    %v1457 = vrot.slane %v1453, %v1456
    %v1458 = vmul.f32 %v1448, %v1457
    %v1459 = vmul.f32 %v1449, %v1457
    %v1460 = vmul.f32 %v1450, %v1457
    %v1461 = vmul.f32 %v1451, %v1457
    %v1462 = vlaneseq
    %v1463 = vshrl.u32 %v1462, 7
    %v1464 = vsub.s32 0, %v1463
    %v1465 = vrot.slane %v73, %v1464
    %v1466 = vmul.f32 %v1458, %v1465
    %v1467 = vmul.f32 %v1459, %v1465
    %v1468 = vmul.f32 %v1460, %v1465
    %v1469 = vmul.f32 %v1461, %v1465
    %v1470 = vlaneseq
    %v1471 = vshrl.u32 %v1470, 7
    %v1472 = vsub.s32 0, %v1471
    %v1473 = vrot.slane %v74, %v1472
    %v1474 = vadd.f32 %v1466, %v1473
    %v1475 = vadd.f32 %v1467, %v1473
    %v1476 = vadd.f32 %v1468, %v1473
    %v1477 = vadd.f32 %v1469, %v1473
    %v1478 = vadd.f32 %v1474, %v217
    %v1479 = vadd.f32 %v1475, %v220
    %v1480 = vadd.f32 %v1476, %v225
    %v1481 = vadd.f32 %v1477, %v228
    %1482 = vst [vmem:[#allocation10] sm:$0xff] %v1478
    %1483 = vst [vmem:[#allocation10 + $0x8] sm:$0xff] %v1479
    %1484 = vst [vmem:[#allocation10 + $0x10] sm:$0xff] %v1480
    %1485 = vst [vmem:[#allocation10 + $0x18] sm:$0xff] %v1481
    // Predicated region
    $region38: #{tpu_custom_call.1} parent=1 // pred_check
      _
    $region39: #{tpu_custom_call.1} parent=1 // pred_check_branch
      %1487 = sbr.rel (0) target = $region41
    $region40: #{tpu_custom_call.1} parent=1 // pred_region
      %s1489 = ssub.s32 512, 512
      %1490 = vsyncadd [#allocation5], %s1489
      %s1491 = sshll.u32 [#allocation9], 4
      %s1492 = int_to_ptr.vmem [resolvable:$true] %s1491
      %1497 = dma.vmem_to_hbm [thread:$0]  %s1492, 512, %s6, [#allocation5], 128, 128, 8
    $region41: #{tpu_custom_call.1} parent=1 // pred_fallthru
      _
    // Predicated region
    $region42: #{tpu_custom_call.1} parent=1 // pred_check
      _
    $region43: #{tpu_custom_call.1} parent=1 // pred_check_branch
      %1499 = sbr.rel (0) target = $region45
    $region44: #{tpu_custom_call.1} parent=1 // pred_region
      %s1501 = ssub.s32 512, 512
      %1502 = vsyncadd [#allocation11], %s1501
      %s1503 = sshll.u32 [#allocation10], 4
      %s1504 = int_to_ptr.vmem [resolvable:$true] %s1503
      %1509 = dma.vmem_to_hbm [thread:$0]  %s1504, 512, %s7, [#allocation11], 128, 128, 8
    $region45: #{tpu_custom_call.1} parent=1 // pred_fallthru
      _
    // Predicated region
    $region46: #{tpu_custom_call.1} parent=1 // pred_check
      _
    $region47: #{tpu_custom_call.1} parent=1 // pred_check_branch
      %1511 = sbr.rel (0) target = $region49
    $region48: #{tpu_custom_call.1} parent=1 // pred_region
      %1512 = dma.done [#allocation5], 512
    $region49: #{tpu_custom_call.1} parent=1 // pred_fallthru
      _
    // Predicated region
    $region50: #{tpu_custom_call.1} parent=1 // pred_check
      _
    $region51: #{tpu_custom_call.1} parent=1 // pred_check_branch
      %1514 = sbr.rel (0) target = $region53
    $region52: #{tpu_custom_call.1} parent=1 // pred_region
      %1515 = dma.done [#allocation11], 512
    $region53: #{tpu_custom_call.1} parent=1 // pred_fallthru
      _
    %1516 = vsyncpa [#allocation4], 1
    %1517 = vsyncpa [#allocation7], 1
    %1518 = vsyncpa [#allocation5], 1
    %1519 = vsyncpa [#allocation11], 1

</llo_original>
